<compile_context>
chip_gen: v7x
topology: tpu7x:2x2x1
jax: 0.10.0
libtpu: 0.0.40
codegen_flags: <defaults>
</compile_context>

<pallas_src>
import functools

import jax
import jax.numpy as jnp
from jax.experimental import pallas as pl
from jax.experimental.pallas import tpu as pltpu


def self_attention_kernel(x_ref, wqkv_ref, wo_ref, bo_ref, out_ref, *,
                          num_heads, head_dim):
    """One batch element: batched per-head QKV -> softmax attention -> out proj."""
    H, d = num_heads, head_dim
    N = x_ref.shape[1]
    Dq = x_ref.shape[2]

    x_bf = x_ref[0].astype(jnp.bfloat16)                     # (N, Dq)
    xb = jnp.broadcast_to(x_bf, (3 * H, N, Dq))              # head-group batch axis

    # Batched Q/K/V projections (scale already folded into the Q weights).
    qkv = jnp.einsum("hnd,hdk->hnk", xb, wqkv_ref[...],
                     preferred_element_type=jnp.float32)      # (3H, N, d) f32
    qkv = qkv.astype(jnp.bfloat16)                            # single vectorized cast

    q = qkv[:H]                                               # (H, N, d)
    k = qkv[H:2 * H]
    v = qkv[2 * H:]

    # Scores + numerically-stable softmax numerator (elementwise math in f32).
    s = jnp.einsum("hnd,hmd->hnm", q, k,
                   preferred_element_type=jnp.float32)        # (H, N, N) f32
    s = s - jnp.max(s, axis=-1, keepdims=True)
    p = jnp.exp(s)                                            # unnormalized, in [0, 1]
    l = jnp.sum(p, axis=-1, keepdims=True)                    # (H, N, 1) f32

    # PV on the unnormalized probabilities; normalize the small result instead
    # of the (H, N, N) matrix (deferred normalization).
    pv = jnp.einsum("hnm,hmd->hnd", p.astype(jnp.bfloat16), v,
                    preferred_element_type=jnp.float32)       # (H, N, d) f32
    pv = pv * pl.reciprocal(l, approx=True)

    # Per-head output projection + sum over heads (replaces concatenate + dot).
    out_h = jnp.einsum("hnd,hdq->hnq", pv.astype(jnp.bfloat16), wo_ref[...],
                       preferred_element_type=jnp.float32)    # (H, N, Dq) f32
    out = jnp.sum(out_h, axis=0) + bo_ref[...]                # (N, Dq)
    out_ref[0] = out.astype(out_ref.dtype)


def _one_shot_vmem_bytes(N, Dq, num_heads, head_dim):
    """Rough per-grid-step VMEM footprint of the one-shot (non-tiled) kernel."""
    H, d = num_heads, head_dim
    f32, bf16 = 4, 2
    b = 0
    b += 2 * (N * Dq * f32) * 2                  # x + out blocks (double-buffered)
    b += (3 * H * Dq * d + H * d * Dq) * bf16 * 2  # resident weights
    b += 3 * H * N * Dq * bf16                   # broadcast x
    b += 3 * H * N * d * (f32 + bf16)            # qkv (f32 acc + bf16)
    b += H * N * N * (2 * f32 + bf16)            # s, p (f32) + p (bf16)
    b += H * N * d * (f32 + bf16)                # pv
    b += H * N * Dq * f32                        # out_h
    return b


def self_attention_pallas(features, Wq, Wk, Wv, Wo, bo, *, num_heads, head_dim):
    """features: (B, N, Dq); W{q,k,v}: (Dq, proj); Wo: (proj, Dq); bo: (Dq,)."""
    B, N, Dq = features.shape
    H, d = num_heads, head_dim
    scale = float(head_dim) ** -0.5

    # Per-head weight layout (h, Dq, d) for batched dot_generals; fold the
    # attention scale into the Q weights; bf16 MXU operands.
    Wq_h = (Wq * scale).reshape(Dq, H, d).transpose(1, 0, 2)
    Wk_h = Wk.reshape(Dq, H, d).transpose(1, 0, 2)
    Wv_h = Wv.reshape(Dq, H, d).transpose(1, 0, 2)
    Wqkv_h = jnp.concatenate([Wq_h, Wk_h, Wv_h], axis=0).astype(jnp.bfloat16)  # (3H, Dq, d)
    Wo_h = Wo.reshape(H, d, Dq).astype(jnp.bfloat16)                           # (H, d, Dq)
    bo2 = bo.reshape(1, Dq).astype(jnp.float32)

    est = _one_shot_vmem_bytes(N, Dq, H, d)
    if est > (48 << 20):
        # TODO(synk): switch to the flash-tiled path instead of failing.
        raise NotImplementedError(
            f"one-shot (H, N, N) scores need ~{est >> 20} MiB VMEM; "
            "flash-style Q/KV tiling not implemented for this size")
    vmem_limit = int(min(64 << 20, max(32 << 20, 2 * est)))

    kernel = functools.partial(self_attention_kernel,
                               num_heads=num_heads, head_dim=head_dim)

    return pl.pallas_call(
        kernel,
        out_shape=jax.ShapeDtypeStruct((B, N, Dq), features.dtype),
        grid_spec=pltpu.PrefetchScalarGridSpec(
            num_scalar_prefetch=0,
            grid=(B,),
            in_specs=[
                pl.BlockSpec((1, N, Dq), lambda b: (b, 0, 0)),          # features
                pl.BlockSpec((3 * H, Dq, d), lambda b: (0, 0, 0)),      # Wqkv (resident)
                pl.BlockSpec((H, d, Dq), lambda b: (0, 0, 0)),          # Wo   (resident)
                pl.BlockSpec((1, Dq), lambda b: (0, 0)),                # out bias
            ],
            out_specs=pl.BlockSpec((1, N, Dq), lambda b: (b, 0, 0)),
        ),
        compiler_params=pltpu.CompilerParams(
            dimension_semantics=("parallel",),
            vmem_limit_bytes=vmem_limit),
    )(features, Wqkv_h, Wo_h, bo2)


def self_attention_reference(features, Wq, Wk, Wv, Wo, bo, *, num_heads, head_dim):
    """Pure-JAX f32 reference mirroring the PyTorch forward exactly."""
    B, N, Dq = features.shape
    q = features @ Wq
    k = features @ Wk
    v = features @ Wv

    def heads2batch(x):
        x = x.reshape(B, N, num_heads, head_dim).transpose(0, 2, 1, 3)
        return x.reshape(B * num_heads, N, head_dim)

    q, k, v = heads2batch(q), heads2batch(k), heads2batch(v)
    scale = head_dim ** -0.5
    attn = jax.nn.softmax(jnp.einsum("bid,bjd->bij", q, k) * scale, axis=-1)
    out = jnp.einsum("bij,bjd->bid", attn, v)
    out = out.reshape(B, num_heads, N, head_dim).transpose(0, 2, 1, 3)
    out = out.reshape(B, N, num_heads * head_dim)
    return out @ Wo + bo


if __name__ == "__main__":
    # Small, module-consistent shapes.
    B = 2
    Hs = Ws = 8
    N = Hs * Ws                       # H'*W' = 64
    num_heads = 4
    head_dim = 16
    query_dim = 32                    # input/output channels
    proj_dim = num_heads * head_dim   # 64

    key = jax.random.PRNGKey(0)
    kx, kq, kk, kv, ko, kb = jax.random.split(key, 6)

    features = jax.random.normal(kx, (B, N, query_dim), dtype=jnp.float32)

    # Parameters stored in (in, out) orientation (transposed vs nn.Linear.weight).
    Wq = 0.1 * jax.random.normal(kq, (query_dim, proj_dim), dtype=jnp.float32)
    Wk = 0.1 * jax.random.normal(kk, (query_dim, proj_dim), dtype=jnp.float32)
    Wv = 0.1 * jax.random.normal(kv, (query_dim, proj_dim), dtype=jnp.float32)
    Wo = 0.1 * jax.random.normal(ko, (proj_dim, query_dim), dtype=jnp.float32)
    bo = 0.1 * jax.random.normal(kb, (query_dim,), dtype=jnp.float32)

    out = self_attention_pallas(features, Wq, Wk, Wv, Wo, bo,
                                num_heads=num_heads, head_dim=head_dim)
    out = jax.block_until_ready(out)

    ref = self_attention_reference(features, Wq, Wk, Wv, Wo, bo,
                                   num_heads=num_heads, head_dim=head_dim)
    ref = jax.block_until_ready(ref)

    assert out.shape == (B, N, query_dim), out.shape
    # bf16 MXU operands + approx reciprocal -> tolerance widened vs pure-f32.
    assert jnp.allclose(out, ref, rtol=5e-2, atol=5e-2), (
        float(jnp.max(jnp.abs(out - ref))))

    print("KERNEL_OK")
</pallas_src>

<mosaic_0001>
module attributes {stable_mosaic.version = 11 : i64} {
  func.func @self_attention_kernel(%arg0: i32, %arg1: memref<1x64x32xf32, #tpu.memory_space<vmem>>, %arg2: memref<12x32x16xbf16, #tpu.memory_space<vmem>>, %arg3: memref<4x16x32xbf16, #tpu.memory_space<vmem>>, %arg4: memref<1x32xf32, #tpu.memory_space<vmem>>, %arg5: memref<1x64x32xf32, #tpu.memory_space<vmem>>) attributes {dimension_semantics = [#tpu.dimension_semantics<parallel>], iteration_bounds = array<i64: 2>, scalar_prefetch = 0 : i64, scratch_operands = 0 : i64, tpu.core_type = #tpu.core_type<tc>, window_params = [{transform_indices = @transform_0, window_bounds = array<i64: 1, 64, 32>}, {pipeline_mode = #tpu.pipeline_mode<synchronous>, transform_indices = @transform_1, window_bounds = array<i64: 12, 32, 16>}, {pipeline_mode = #tpu.pipeline_mode<synchronous>, transform_indices = @transform_2, window_bounds = array<i64: 4, 16, 32>}, {pipeline_mode = #tpu.pipeline_mode<synchronous>, transform_indices = @transform_3, window_bounds = array<i64: 1, 32>}, {transform_indices = @transform_4, window_bounds = array<i64: 1, 64, 32>}]} {
    %c0 = arith.constant 0 : index
    %c0_0 = arith.constant 0 : index
    %c0_1 = arith.constant 0 : index
    %0 = vector.load %arg1[%c0, %c0_0, %c0_1] : memref<1x64x32xf32, #tpu.memory_space<vmem>>, vector<1x64x32xf32>
    %1 = vector.shape_cast %0 : vector<1x64x32xf32> to vector<64x32xf32>
    %2 = arith.truncf %1 : vector<64x32xf32> to vector<64x32xbf16>
    %3 = vector.shape_cast %2 : vector<64x32xbf16> to vector<1x64x32xbf16>
    %4 = vector.broadcast %3 : vector<1x64x32xbf16> to vector<12x64x32xbf16>
    %c0_2 = arith.constant 0 : index
    %c0_3 = arith.constant 0 : index
    %c0_4 = arith.constant 0 : index
    %5 = vector.load %arg2[%c0_2, %c0_3, %c0_4] : memref<12x32x16xbf16, #tpu.memory_space<vmem>>, vector<12x32x16xbf16>
    "tpu.trace_start"() <{level = 10 : i32, message = "hnd,hdk->hnk"}> : () -> ()
    %cst = arith.constant dense<0.000000e+00> : vector<12x64x16xf32>
    %6 = tpu.matmul %4, %5, %cst {dimension_numbers = #tpu.dot_dimension_numbers<[2], [1], [1], [2], [0, 0, 0, 1, 1, 2], [0], [0]>} : vector<12x64x32xbf16>, vector<12x32x16xbf16>, vector<12x64x16xf32> -> vector<12x64x16xf32>
    "tpu.trace_stop"() : () -> ()
    %7 = arith.truncf %6 : vector<12x64x16xf32> to vector<12x64x16xbf16>
    %8 = vector.extract_strided_slice %7 {offsets = [0, 0, 0], sizes = [4, 64, 16], strides = [1, 1, 1]} : vector<12x64x16xbf16> to vector<4x64x16xbf16>
    %9 = vector.extract_strided_slice %7 {offsets = [4, 0, 0], sizes = [4, 64, 16], strides = [1, 1, 1]} : vector<12x64x16xbf16> to vector<4x64x16xbf16>
    %10 = vector.extract_strided_slice %7 {offsets = [8, 0, 0], sizes = [4, 64, 16], strides = [1, 1, 1]} : vector<12x64x16xbf16> to vector<4x64x16xbf16>
    "tpu.trace_start"() <{level = 10 : i32, message = "hnd,hmd->hnm"}> : () -> ()
    %cst_5 = arith.constant dense<0.000000e+00> : vector<4x64x64xf32>
    %11 = tpu.matmul %8, %9, %cst_5 {dimension_numbers = #tpu.dot_dimension_numbers<[2], [2], [1], [1], [0, 0, 0, 1, 1, 1], [0], [0]>} : vector<4x64x16xbf16>, vector<4x64x16xbf16>, vector<4x64x64xf32> -> vector<4x64x64xf32>
    "tpu.trace_stop"() : () -> ()
    %cst_6 = arith.constant dense<0xFF800000> : vector<4x64xf32>
    %12 = vector.multi_reduction <maximumf>, %11, %cst_6 [2] : vector<4x64x64xf32> to vector<4x64xf32>
    %13 = vector.shape_cast %12 : vector<4x64xf32> to vector<4x64x1xf32>
    %14 = vector.broadcast %13 : vector<4x64x1xf32> to vector<4x64x64xf32>
    %15 = arith.subf %11, %14 : vector<4x64x64xf32>
    %16 = math.exp %15 : vector<4x64x64xf32>
    %cst_7 = arith.constant dense<0.000000e+00> : vector<4x64xf32>
    %17 = vector.multi_reduction <add>, %16, %cst_7 [2] : vector<4x64x64xf32> to vector<4x64xf32>
    %18 = vector.shape_cast %17 : vector<4x64xf32> to vector<4x64x1xf32>
    %19 = arith.truncf %16 : vector<4x64x64xf32> to vector<4x64x64xbf16>
    "tpu.trace_start"() <{level = 10 : i32, message = "hnm,hmd->hnd"}> : () -> ()
    %cst_8 = arith.constant dense<0.000000e+00> : vector<4x64x16xf32>
    %20 = tpu.matmul %19, %10, %cst_8 {dimension_numbers = #tpu.dot_dimension_numbers<[2], [1], [1], [2], [0, 0, 0, 1, 1, 2], [0], [0]>} : vector<4x64x64xbf16>, vector<4x64x16xbf16>, vector<4x64x16xf32> -> vector<4x64x16xf32>
    "tpu.trace_stop"() : () -> ()
    %21 = tpu.reciprocal %18 {approx = true} : vector<4x64x1xf32> -> vector<4x64x1xf32>
    %22 = vector.broadcast %21 : vector<4x64x1xf32> to vector<4x64x16xf32>
    %23 = arith.mulf %20, %22 : vector<4x64x16xf32>
    %24 = arith.truncf %23 : vector<4x64x16xf32> to vector<4x64x16xbf16>
    %c0_9 = arith.constant 0 : index
    %c0_10 = arith.constant 0 : index
    %c0_11 = arith.constant 0 : index
    %25 = vector.load %arg3[%c0_9, %c0_10, %c0_11] : memref<4x16x32xbf16, #tpu.memory_space<vmem>>, vector<4x16x32xbf16>
    "tpu.trace_start"() <{level = 10 : i32, message = "hnd,hdq->hnq"}> : () -> ()
    %cst_12 = arith.constant dense<0.000000e+00> : vector<4x64x32xf32>
    %26 = tpu.matmul %24, %25, %cst_12 {dimension_numbers = #tpu.dot_dimension_numbers<[2], [1], [1], [2], [0, 0, 0, 1, 1, 2], [0], [0]>} : vector<4x64x16xbf16>, vector<4x16x32xbf16>, vector<4x64x32xf32> -> vector<4x64x32xf32>
    "tpu.trace_stop"() : () -> ()
    %cst_13 = arith.constant dense<0.000000e+00> : vector<64x32xf32>
    %27 = vector.multi_reduction <add>, %26, %cst_13 [0] : vector<4x64x32xf32> to vector<64x32xf32>
    %c0_14 = arith.constant 0 : index
    %c0_15 = arith.constant 0 : index
    %28 = vector.load %arg4[%c0_14, %c0_15] : memref<1x32xf32, #tpu.memory_space<vmem>>, vector<1x32xf32>
    %29 = vector.broadcast %28 : vector<1x32xf32> to vector<64x32xf32>
    %30 = arith.addf %27, %29 : vector<64x32xf32>
    %c0_16 = arith.constant 0 : index
    %c0_17 = arith.constant 0 : index
    %c0_18 = arith.constant 0 : index
    %31 = vector.load %arg5[%c0_16, %c0_17, %c0_18] : memref<1x64x32xf32, #tpu.memory_space<vmem>>, vector<1x64x32xf32>
    %32 = vector.shape_cast %31 : vector<1x64x32xf32> to vector<64x32xf32>
    %33 = vector.shape_cast %30 : vector<64x32xf32> to vector<1x64x32xf32>
    tpu.vector_store %arg5[%c0_16, %c0_17, %c0_18], %33 {strides = array<i32>} : memref<1x64x32xf32, #tpu.memory_space<vmem>>, vector<1x64x32xf32>,
    return
  }
  func.func @transform_0(%arg0: i32) -> (i32, i32, i32) {
    %c0_i32 = arith.constant 0 : i32
    %c0_i32_0 = arith.constant 0 : i32
    %c0_i32_1 = arith.constant 0 : i32
    return %arg0, %c0_i32, %c0_i32_0 : i32, i32, i32
  }
  func.func @transform_1(%arg0: i32) -> (i32, i32, i32) {
    %c0_i32 = arith.constant 0 : i32
    %c0_i32_0 = arith.constant 0 : i32
    %c0_i32_1 = arith.constant 0 : i32
    %c0_i32_2 = arith.constant 0 : i32
    return %c0_i32, %c0_i32_0, %c0_i32_1 : i32, i32, i32
  }
  func.func @transform_2(%arg0: i32) -> (i32, i32, i32) {
    %c0_i32 = arith.constant 0 : i32
    %c0_i32_0 = arith.constant 0 : i32
    %c0_i32_1 = arith.constant 0 : i32
    %c0_i32_2 = arith.constant 0 : i32
    return %c0_i32, %c0_i32_0, %c0_i32_1 : i32, i32, i32
  }
  func.func @transform_3(%arg0: i32) -> (i32, i32) {
    %c0_i32 = arith.constant 0 : i32
    %c0_i32_0 = arith.constant 0 : i32
    %c0_i32_1 = arith.constant 0 : i32
    return %c0_i32, %c0_i32_0 : i32, i32
  }
  func.func @transform_4(%arg0: i32) -> (i32, i32, i32) {
    %c0_i32 = arith.constant 0 : i32
    %c0_i32_0 = arith.constant 0 : i32
    %c0_i32_1 = arith.constant 0 : i32
    return %arg0, %c0_i32, %c0_i32_0 : i32, i32, i32
  }
}

</mosaic_0001>

<llo_original>
// kernel: tpu_custom_call.1
$region0: #{tpu_custom_call.1}
  #allocation0 [shape = 'u32[]', space=smem, size = 0x4, offset = 0x4, fixed_abs, tag = 'smem constant byte address 0x4 - core index']
  #allocation1 [shape = 'u32[144,128]{1,0:T(1,128)}', space=vmem, size = 0x12000, scoped, tag = 'internal scratch']
  %s0 = inlined_call_operand.vmem [shape: f32[2,64,32], index: 0, kind: input, shape index: {}]
  %s1 = inlined_call_operand.vmem [shape: bf16[12,32,16], index: 1, kind: input, shape index: {}]
  %s2 = inlined_call_operand.vmem [shape: bf16[4,16,32], index: 2, kind: input, shape index: {}]
  %s3 = inlined_call_operand.vmem [shape: f32[1,32], index: 3, kind: input, shape index: {}]
  %s4 = inlined_call_operand.vmem [shape: f32[2,64,32], index: 4, kind: output, shape index: {}]
  %s5 = sld [smem:[#allocation0]]
  $region49: #{tpu_custom_call.1} parent=0
    _
  %s7 = ssub.s32 1, %s5
  %s8 = scalar_select 0, %s7, %s5
  loop: start=0, step=1, limit=4
  $region2: #{tpu_custom_call.1} parent=0 // loop_pre_header
    _
  $region3: #{tpu_custom_call.1} parent=0 // loop_header
    %s10 = sphi 0, %s14
    %p11 = scmp.ge.s32.totalorder %s10, 4
    %s20 = sphi 0, %s22
    %s23 = sphi 0, %s20
    %s24 = sphi 0, %s23
    %s40 = sphi 0, %s24
    %s44 = sphi 0, %s44
    %s46 = sphi 0, %s44
    %s47 = sphi 0, %s46
    %s61 = sphi 0, %s47
    %s65 = sphi 0, %s65
    %s67 = sphi 0, %s65
    %s68 = sphi 0, %s67
    %s82 = sphi 0, %s68
    %s86 = sphi 0, %s86
    %s88 = sphi 0, %s86
    %s89 = sphi 0, %s88
    %s103 = sphi 0, %s89
    %s109 = sphi 0, %s111
    %s112 = sphi 0, %s109
    %s113 = sphi 0, %s112
    %s129 = sphi 0, %s113
  $region4: #{tpu_custom_call.1} parent=0 // loop_header_branch
    %13 = sbr.rel (%p11) target = $region8
  $region5: #{tpu_custom_call.1} parent=0 // loop_body
    %s15 = ssub.s32 %s10, 1
    %s16 = ssub.s32 %s10, 2
    %s17 = sadd.s32 %s10, 1
    %s18 = ssub.s32 %s10, %s17
    %p19 = scmp.eq.s32.totalorder %s18, 0
    %s21 = sadd.s32 %s20, 1
    %s22 = scalar_select %p19, %s20, %s21
    %p25 = pneg %p19
    %p26 = scmp.eq.s32.totalorder %s10, 1
    %p27 = por %p25, %p26
    %p28 = scmp.ne.s32.totalorder %s20, %s23
    %p29 = scmp.eq.s32.totalorder %s10, 0
    %p30 = por %p28, %p29
    %p31 = scmp.ne.s32.totalorder %s20, %s23
    %p32 = scmp.eq.s32.totalorder %s15, 1
    %p33 = por %p31, %p32
    %p34 = scmp.ne.s32.totalorder %s23, %s24
    %p35 = scmp.eq.s32.totalorder %s15, 0
    %p36 = por %p34, %p35
    %p37 = scmp.ne.s32.totalorder %s23, %s24
    %p38 = scmp.eq.s32.totalorder %s16, 1
    %p39 = por %p37, %p38
    %p41 = scmp.ne.s32.totalorder %s24, %s40
    %p42 = scmp.eq.s32.totalorder %s16, 0
    %p43 = por %p41, %p42
    %s45 = sadd.s32 %s44, 1
    %p48 = scmp.eq.s32.totalorder %s10, 1
    %p49 = scmp.ne.s32.totalorder %s44, %s46
    %p50 = scmp.eq.s32.totalorder %s10, 0
    %p51 = por %p49, %p50
    %p52 = scmp.ne.s32.totalorder %s44, %s46
    %p53 = scmp.eq.s32.totalorder %s15, 1
    %p54 = por %p52, %p53
    %p55 = scmp.ne.s32.totalorder %s46, %s47
    %p56 = scmp.eq.s32.totalorder %s15, 0
    %p57 = por %p55, %p56
    %p58 = scmp.ne.s32.totalorder %s46, %s47
    %p59 = scmp.eq.s32.totalorder %s16, 1
    %p60 = por %p58, %p59
    %p62 = scmp.ne.s32.totalorder %s47, %s61
    %p63 = scmp.eq.s32.totalorder %s16, 0
    %p64 = por %p62, %p63
    %s66 = sadd.s32 %s65, 1
    %p69 = scmp.eq.s32.totalorder %s10, 1
    %p70 = scmp.ne.s32.totalorder %s65, %s67
    %p71 = scmp.eq.s32.totalorder %s10, 0
    %p72 = por %p70, %p71
    %p73 = scmp.ne.s32.totalorder %s65, %s67
    %p74 = scmp.eq.s32.totalorder %s15, 1
    %p75 = por %p73, %p74
    %p76 = scmp.ne.s32.totalorder %s67, %s68
    %p77 = scmp.eq.s32.totalorder %s15, 0
    %p78 = por %p76, %p77
    %p79 = scmp.ne.s32.totalorder %s67, %s68
    %p80 = scmp.eq.s32.totalorder %s16, 1
    %p81 = por %p79, %p80
    %p83 = scmp.ne.s32.totalorder %s68, %s82
    %p84 = scmp.eq.s32.totalorder %s16, 0
    %p85 = por %p83, %p84
    %s87 = sadd.s32 %s86, 1
    %p90 = scmp.eq.s32.totalorder %s10, 1
    %p91 = scmp.ne.s32.totalorder %s86, %s88
    %p92 = scmp.eq.s32.totalorder %s10, 0
    %p93 = por %p91, %p92
    %p94 = scmp.ne.s32.totalorder %s86, %s88
    %p95 = scmp.eq.s32.totalorder %s15, 1
    %p96 = por %p94, %p95
    %p97 = scmp.ne.s32.totalorder %s88, %s89
    %p98 = scmp.eq.s32.totalorder %s15, 0
    %p99 = por %p97, %p98
    %p100 = scmp.ne.s32.totalorder %s88, %s89
    %p101 = scmp.eq.s32.totalorder %s16, 1
    %p102 = por %p100, %p101
    %p104 = scmp.ne.s32.totalorder %s89, %s103
    %p105 = scmp.eq.s32.totalorder %s16, 0
    %p106 = por %p104, %p105
    %s107 = ssub.s32 %s10, %s17
    %p108 = scmp.eq.s32.totalorder %s107, 0
    %s110 = sadd.s32 %s109, 1
    %s111 = scalar_select %p108, %s109, %s110
    %p114 = pneg %p108
    %p115 = scmp.eq.s32.totalorder %s10, 1
    %p116 = por %p114, %p115
    %p117 = scmp.ne.s32.totalorder %s109, %s112
    %p118 = scmp.eq.s32.totalorder %s10, 0
    %p119 = por %p117, %p118
    %p120 = scmp.ne.s32.totalorder %s109, %s112
    %p121 = scmp.eq.s32.totalorder %s15, 1
    %p122 = por %p120, %p121
    %p123 = scmp.ne.s32.totalorder %s112, %s113
    %p124 = scmp.eq.s32.totalorder %s15, 0
    %p125 = por %p123, %p124
    %p126 = scmp.ne.s32.totalorder %s112, %s113
    %p127 = scmp.eq.s32.totalorder %s16, 1
    %p128 = por %p126, %p127
    %p130 = scmp.ne.s32.totalorder %s113, %s129
    %p131 = scmp.eq.s32.totalorder %s16, 0
    %p132 = por %p130, %p131
    %p133 = scmp.le.s32.totalorder 1, %s10
    %p134 = scmp.lt.s32.totalorder %s10, 3
    %p135 = pnand %p133, %p134
    %p136 = pneg %p135
    // Predicated region
    $region9: #{tpu_custom_call.1} parent=5 // pred_check
      _
    $region10: #{tpu_custom_call.1} parent=5 // pred_check_branch
      %138 = sbr.rel (%p135) target = $region12
    $region11: #{tpu_custom_call.1} parent=5 // pred_region
      %s139 = ssub.s32 %s10, 1
      // Predicated region
      $region13: #{tpu_custom_call.1} parent=11 // pred_check
        %p140 = pneg %p57
      $region14: #{tpu_custom_call.1} parent=11 // pred_check_branch
        %142 = sbr.rel (%p140) target = $region16
      $region15: #{tpu_custom_call.1} parent=11 // pred_region
        _
      $region16: #{tpu_custom_call.1} parent=11 // pred_fallthru
        _
      // Predicated region
      $region17: #{tpu_custom_call.1} parent=11 // pred_check
        %p143 = pneg %p78
      $region18: #{tpu_custom_call.1} parent=11 // pred_check_branch
        %145 = sbr.rel (%p143) target = $region20
      $region19: #{tpu_custom_call.1} parent=11 // pred_region
        _
      $region20: #{tpu_custom_call.1} parent=11 // pred_fallthru
        _
      // Predicated region
      $region21: #{tpu_custom_call.1} parent=11 // pred_check
        %p146 = pneg %p99
      $region22: #{tpu_custom_call.1} parent=11 // pred_check_branch
        %148 = sbr.rel (%p146) target = $region24
      $region23: #{tpu_custom_call.1} parent=11 // pred_region
        _
      $region24: #{tpu_custom_call.1} parent=11 // pred_fallthru
        _
    $region12: #{tpu_custom_call.1} parent=5 // pred_fallthru
      _
    %p149 = scmp.lt.s32.totalorder %s10, 2
    // Predicated region
    $region25: #{tpu_custom_call.1} parent=5 // pred_check
      %p150 = pneg %p149
    $region26: #{tpu_custom_call.1} parent=5 // pred_check_branch
      %152 = sbr.rel (%p150) target = $region28
    $region27: #{tpu_custom_call.1} parent=5 // pred_region
      // Predicated region
      $region29: #{tpu_custom_call.1} parent=27 // pred_check
        %p153 = pneg %p30
      $region30: #{tpu_custom_call.1} parent=27 // pred_check_branch
        %155 = sbr.rel (%p153) target = $region32
      $region31: #{tpu_custom_call.1} parent=27 // pred_region
        %p156 = scmp.lt.s32.totalorder %s10, 1
        %s157 = scalar_select %p156, %s10, 1
        %s158 = smul.addr %s157, 8
        %s159 = smul.addr %s158, 8
        %s160 = scalar_lea.vmem %s0, %s159
      $region32: #{tpu_custom_call.1} parent=27 // pred_fallthru
        _
    $region28: #{tpu_custom_call.1} parent=5 // pred_fallthru
      _
    %p161 = scmp.le.s32.totalorder 1, %s10
    %p162 = scmp.lt.s32.totalorder %s10, 3
    %p163 = pnand %p161, %p162
    %p164 = pneg %p163
    // Predicated region
    $region33: #{tpu_custom_call.1} parent=5 // pred_check
      _
    $region34: #{tpu_custom_call.1} parent=5 // pred_check_branch
      %166 = sbr.rel (%p163) target = $region36
    $region35: #{tpu_custom_call.1} parent=5 // pred_region
      %s167 = ssub.s32 %s10, 1
      %p168 = scmp.lt.s32.totalorder %s15, 1
      %s169 = scalar_select %p168, %s15, 1
      %s170 = smul.addr %s169, 8
      %s171 = smul.addr %s170, 8
      %s172 = scalar_lea.vmem %s0, %s171
      %p173 = pneg %p36
      %p174 = pneg %p33
      %p175 = pneg %p57
      %p176 = pneg %p54
      %p177 = pneg %p78
      %p178 = pneg %p75
      %p179 = pneg %p99
      %p180 = pneg %p96
      %p181 = pneg %p125
      %p182 = pneg %p122
      %p183 = scmp.lt.s32.totalorder %s15, 1
      %s184 = scalar_select %p183, %s15, 1
      %s185 = smul.addr %s184, 8
      %s186 = smul.addr %s185, 8
      %s187 = scalar_lea.vmem %s4, %s186
      %p188 = scmp.lt.s32.totalorder %s15, 1
      %s189 = scalar_select %p188, %s15, 1
      %s190 = smul.addr %s189, 8
      %s191 = smul.addr %s190, 8
      %s192 = scalar_lea.vmem %s0, %s191
      %p193 = scmp.lt.s32.totalorder %s15, 1
      %s194 = scalar_select %p193, %s15, 1
      %s195 = smul.addr %s194, 8
      %s196 = smul.addr %s195, 8
      %s197 = scalar_lea.vmem %s4, %s196
      %v199 = vld [vmem:[%s192] sm:$0xff]
      %v200 = vld [vmem:[%s192 + $0x8] sm:$0xff]
      %v201 = vld [vmem:[%s192 + $0x10] sm:$0xff]
      %v202 = vld [vmem:[%s192 + $0x18] sm:$0xff]
      %v203 = vld [vmem:[%s192 + $0x20] sm:$0xff]
      %v204 = vld [vmem:[%s192 + $0x28] sm:$0xff]
      %v205 = vld [vmem:[%s192 + $0x30] sm:$0xff]
      %v206 = vld [vmem:[%s192 + $0x38] sm:$0xff]
      %v207 = vpack.c.bf16 %v200, %v199
      %v208 = vpack.c.bf16 %v202, %v201
      %v209 = vpack.c.bf16 %v204, %v203
      %v210 = vpack.c.bf16 %v206, %v205
      %v211 = vld [vmem:[%s1] sm:$0xf]
      %v212 = vld [vmem:[%s1 + $0x4] sm:$0xf]
      %v213 = vld [vmem:[%s1 + $0x8] sm:$0xf]
      %v214 = vld [vmem:[%s1 + $0xc] sm:$0xf]
      %v215 = vld [vmem:[%s1 + $0x10] sm:$0xf]
      %v216 = vld [vmem:[%s1 + $0x14] sm:$0xf]
      %v217 = vld [vmem:[%s1 + $0x18] sm:$0xf]
      %v218 = vld [vmem:[%s1 + $0x1c] sm:$0xf]
      %v219 = vld [vmem:[%s1 + $0x20] sm:$0xf]
      %v220 = vld [vmem:[%s1 + $0x24] sm:$0xf]
      %v221 = vld [vmem:[%s1 + $0x28] sm:$0xf]
      %v222 = vld [vmem:[%s1 + $0x2c] sm:$0xf]
      %v223 = vld [vmem:[%s1 + $0x30] sm:$0xf]
      %v224 = vld [vmem:[%s1 + $0x34] sm:$0xf]
      %v225 = vld [vmem:[%s1 + $0x38] sm:$0xf]
      %v226 = vld [vmem:[%s1 + $0x3c] sm:$0xf]
      %v227 = vld [vmem:[%s1 + $0x40] sm:$0xf]
      %v228 = vld [vmem:[%s1 + $0x44] sm:$0xf]
      %v229 = vld [vmem:[%s1 + $0x48] sm:$0xf]
      %v230 = vld [vmem:[%s1 + $0x4c] sm:$0xf]
      %v231 = vld [vmem:[%s1 + $0x50] sm:$0xf]
      %v232 = vld [vmem:[%s1 + $0x54] sm:$0xf]
      %v233 = vld [vmem:[%s1 + $0x58] sm:$0xf]
      %v234 = vld [vmem:[%s1 + $0x5c] sm:$0xf]
      %v235 = vld [vmem:[%s1 + $0x60] sm:$0xf]
      %v236 = vld [vmem:[%s1 + $0x64] sm:$0xf]
      %v237 = vld [vmem:[%s1 + $0x68] sm:$0xf]
      %v238 = vld [vmem:[%s1 + $0x6c] sm:$0xf]
      %v239 = vld [vmem:[%s1 + $0x70] sm:$0xf]
      %v240 = vld [vmem:[%s1 + $0x74] sm:$0xf]
      %v241 = vld [vmem:[%s1 + $0x78] sm:$0xf]
      %v242 = vld [vmem:[%s1 + $0x7c] sm:$0xf]
      %v243 = vld [vmem:[%s1 + $0x80] sm:$0xf]
      %v244 = vld [vmem:[%s1 + $0x84] sm:$0xf]
      %v245 = vld [vmem:[%s1 + $0x88] sm:$0xf]
      %v246 = vld [vmem:[%s1 + $0x8c] sm:$0xf]
      %v247 = vld [vmem:[%s1 + $0x90] sm:$0xf]
      %v248 = vld [vmem:[%s1 + $0x94] sm:$0xf]
      %v249 = vld [vmem:[%s1 + $0x98] sm:$0xf]
      %v250 = vld [vmem:[%s1 + $0x9c] sm:$0xf]
      %v251 = vld [vmem:[%s1 + $0xa0] sm:$0xf]
      %v252 = vld [vmem:[%s1 + $0xa4] sm:$0xf]
      %v253 = vld [vmem:[%s1 + $0xa8] sm:$0xf]
      %v254 = vld [vmem:[%s1 + $0xac] sm:$0xf]
      %v255 = vld [vmem:[%s1 + $0xb0] sm:$0xf]
      %v256 = vld [vmem:[%s1 + $0xb4] sm:$0xf]
      %v257 = vld [vmem:[%s1 + $0xb8] sm:$0xf]
      %v258 = vld [vmem:[%s1 + $0xbc] sm:$0xf]
      %v263 = vunpack.c.l.b16 %v211
      %v264 = vunpack.c.l.b16 %v212
      %v265 = vunpack.c.l.b16 %v213
      %v266 = vunpack.c.l.b16 %v214
      %v267 = vpack.c.b16 %v264, %v263
      %v268 = vpack.c.b16 %v266, %v265
      %vm271 = vcmask 261120
      %v273 = vsel %vm271, %v207, 0
      %v276 = vsel %vm271, %v208, 0
      %v279 = vsel %vm271, %v209, 0
      %v282 = vsel %vm271, %v210, 0
      %284 = vmatprep.subr.bf16.mxu0 0
      %285 = vmatpush1.bf16.msra.mxu0 %v267
      %286 = vmatprep.subr.bf16.mxu0 0
      %287 = vmatpush1.bf16.msra.mxu0 %v268
      %288 = vmatprep.subr.bf16.mxu0 0
      %289 = vmatpush1.bf16.msra.mxu0 0
      %290 = vmatprep.subr.bf16.mxu0 0
      %291 = vmatpush1.bf16.msra.mxu0 0
      %292 = vmatprep.subr.bf16.mxu0 0
      %293 = vmatpush1.bf16.msra.mxu0 0
      %294 = vmatprep.subr.bf16.mxu0 0
      %295 = vmatpush1.bf16.msra.mxu0 0
      %296 = vmatprep.subr.bf16.mxu0 0
      %297 = vmatpush1.bf16.msra.mxu0 0
      %298 = vmatprep.subr.bf16.mxu0 0
      %299 = vmatpush1.bf16.msra.mxu0 0
      %300 = vmatprep.subr.bf16.mxu0 0
      %301 = vmatpush1.bf16.msra.mxu0 0
      %302 = vmatprep.subr.bf16.mxu0 0
      %303 = vmatpush1.bf16.msra.mxu0 0
      %304 = vmatprep.subr.bf16.mxu0 0
      %305 = vmatpush1.bf16.msra.mxu0 0
      %306 = vmatprep.subr.bf16.mxu0 0
      %307 = vmatpush1.bf16.msra.mxu0 0
      %308 = vmatprep.subr.bf16.mxu0 0
      %309 = vmatpush1.bf16.msra.mxu0 0
      %310 = vmatprep.subr.bf16.mxu0 0
      %311 = vmatpush1.bf16.msra.mxu0 0
      %312 = vmatprep.subr.bf16.mxu0 0
      %313 = vmatpush1.bf16.msra.mxu0 0
      %314 = vmatprep.subr.bf16.mxu0 0
      %315 = vmatpush1.bf16.msra.mxu0 0
      %316 = vmatprep.mubr.bf16.mxu0 0
      %317 = vmatmul.mubr.bf16.gmra.mrb[0].mxu0 %v273
      %v318 = vpop.f32.mrb[0].mxu0
      %v319 = vadd.f32 0.0, %v318
      %v320 = vpop.f32.mrb[0].mxu0
      %v321 = vpop.f32.mrb[0].mxu0
      %v322 = vadd.f32 0.0, %v321
      %v323 = vpop.f32.mrb[0].mxu0
      %324 = vmatprep.mubr.bf16.mxu0 0
      %325 = vmatmul.mubr.bf16.gmra.mrb[0].mxu0 %v276
      %v326 = vpop.f32.mrb[0].mxu0
      %v327 = vadd.f32 0.0, %v326
      %v328 = vpop.f32.mrb[0].mxu0
      %v329 = vpop.f32.mrb[0].mxu0
      %v330 = vadd.f32 0.0, %v329
      %v331 = vpop.f32.mrb[0].mxu0
      %332 = vmatprep.mubr.bf16.mxu0 0
      %333 = vmatmul.mubr.bf16.gmra.mrb[0].mxu0 %v279
      %v334 = vpop.f32.mrb[0].mxu0
      %v335 = vadd.f32 0.0, %v334
      %v336 = vpop.f32.mrb[0].mxu0
      %v337 = vpop.f32.mrb[0].mxu0
      %v338 = vadd.f32 0.0, %v337
      %v339 = vpop.f32.mrb[0].mxu0
      %340 = vmatprep.mubr.bf16.mxu0 0
      %341 = vmatmul.mubr.bf16.gmra.mrb[0].mxu0 %v282
      %v342 = vpop.f32.mrb[0].mxu0
      %v343 = vadd.f32 0.0, %v342
      %v344 = vpop.f32.mrb[0].mxu0
      %v345 = vpop.f32.mrb[0].mxu0
      %v346 = vadd.f32 0.0, %v345
      %v347 = vpop.f32.mrb[0].mxu0
      %348 = vdwg.mxu0
      %v353 = vunpack.c.l.b16 %v215
      %v354 = vunpack.c.l.b16 %v216
      %v355 = vunpack.c.l.b16 %v217
      %v356 = vunpack.c.l.b16 %v218
      %v357 = vpack.c.b16 %v354, %v353
      %v358 = vpack.c.b16 %v356, %v355
      %361 = vmatprep.subr.bf16.mxu0 0
      %362 = vmatpush1.bf16.msra.mxu0 %v357
      %363 = vmatprep.subr.bf16.mxu0 0
      %364 = vmatpush1.bf16.msra.mxu0 %v358
      %365 = vmatprep.subr.bf16.mxu0 0
      %366 = vmatpush1.bf16.msra.mxu0 0
      %367 = vmatprep.subr.bf16.mxu0 0
      %368 = vmatpush1.bf16.msra.mxu0 0
      %369 = vmatprep.subr.bf16.mxu0 0
      %370 = vmatpush1.bf16.msra.mxu0 0
      %371 = vmatprep.subr.bf16.mxu0 0
      %372 = vmatpush1.bf16.msra.mxu0 0
      %373 = vmatprep.subr.bf16.mxu0 0
      %374 = vmatpush1.bf16.msra.mxu0 0
      %375 = vmatprep.subr.bf16.mxu0 0
      %376 = vmatpush1.bf16.msra.mxu0 0
      %377 = vmatprep.subr.bf16.mxu0 0
      %378 = vmatpush1.bf16.msra.mxu0 0
      %379 = vmatprep.subr.bf16.mxu0 0
      %380 = vmatpush1.bf16.msra.mxu0 0
      %381 = vmatprep.subr.bf16.mxu0 0
      %382 = vmatpush1.bf16.msra.mxu0 0
      %383 = vmatprep.subr.bf16.mxu0 0
      %384 = vmatpush1.bf16.msra.mxu0 0
      %385 = vmatprep.subr.bf16.mxu0 0
      %386 = vmatpush1.bf16.msra.mxu0 0
      %387 = vmatprep.subr.bf16.mxu0 0
      %388 = vmatpush1.bf16.msra.mxu0 0
      %389 = vmatprep.subr.bf16.mxu0 0
      %390 = vmatpush1.bf16.msra.mxu0 0
      %391 = vmatprep.subr.bf16.mxu0 0
      %392 = vmatpush1.bf16.msra.mxu0 0
      %393 = vmatprep.mubr.bf16.mxu0 0
      %394 = vmatmul.mubr.bf16.gmra.mrb[0].mxu0 %v273
      %v395 = vpop.f32.mrb[0].mxu0
      %v396 = vadd.f32 0.0, %v395
      %v397 = vpop.f32.mrb[0].mxu0
      %v398 = vpop.f32.mrb[0].mxu0
      %v399 = vadd.f32 0.0, %v398
      %v400 = vpop.f32.mrb[0].mxu0
      %401 = vmatprep.mubr.bf16.mxu0 0
      %402 = vmatmul.mubr.bf16.gmra.mrb[0].mxu0 %v276
      %v403 = vpop.f32.mrb[0].mxu0
      %v404 = vadd.f32 0.0, %v403
      %v405 = vpop.f32.mrb[0].mxu0
      %v406 = vpop.f32.mrb[0].mxu0
      %v407 = vadd.f32 0.0, %v406
      %v408 = vpop.f32.mrb[0].mxu0
      %409 = vmatprep.mubr.bf16.mxu0 0
      %410 = vmatmul.mubr.bf16.gmra.mrb[0].mxu0 %v279
      %v411 = vpop.f32.mrb[0].mxu0
      %v412 = vadd.f32 0.0, %v411
      %v413 = vpop.f32.mrb[0].mxu0
      %v414 = vpop.f32.mrb[0].mxu0
      %v415 = vadd.f32 0.0, %v414
      %v416 = vpop.f32.mrb[0].mxu0
      %417 = vmatprep.mubr.bf16.mxu0 0
      %418 = vmatmul.mubr.bf16.gmra.mrb[0].mxu0 %v282
      %v419 = vpop.f32.mrb[0].mxu0
      %v420 = vadd.f32 0.0, %v419
      %v421 = vpop.f32.mrb[0].mxu0
      %v422 = vpop.f32.mrb[0].mxu0
      %v423 = vadd.f32 0.0, %v422
      %v424 = vpop.f32.mrb[0].mxu0
      %425 = vdwg.mxu0
      %v430 = vunpack.c.l.b16 %v219
      %v431 = vunpack.c.l.b16 %v220
      %v432 = vunpack.c.l.b16 %v221
      %v433 = vunpack.c.l.b16 %v222
      %v434 = vpack.c.b16 %v431, %v430
      %v435 = vpack.c.b16 %v433, %v432
      %438 = vmatprep.subr.bf16.mxu0 0
      %439 = vmatpush1.bf16.msra.mxu0 %v434
      %440 = vmatprep.subr.bf16.mxu0 0
      %441 = vmatpush1.bf16.msra.mxu0 %v435
      %442 = vmatprep.subr.bf16.mxu0 0
      %443 = vmatpush1.bf16.msra.mxu0 0
      %444 = vmatprep.subr.bf16.mxu0 0
      %445 = vmatpush1.bf16.msra.mxu0 0
      %446 = vmatprep.subr.bf16.mxu0 0
      %447 = vmatpush1.bf16.msra.mxu0 0
      %448 = vmatprep.subr.bf16.mxu0 0
      %449 = vmatpush1.bf16.msra.mxu0 0
      %450 = vmatprep.subr.bf16.mxu0 0
      %451 = vmatpush1.bf16.msra.mxu0 0
      %452 = vmatprep.subr.bf16.mxu0 0
      %453 = vmatpush1.bf16.msra.mxu0 0
      %454 = vmatprep.subr.bf16.mxu0 0
      %455 = vmatpush1.bf16.msra.mxu0 0
      %456 = vmatprep.subr.bf16.mxu0 0
      %457 = vmatpush1.bf16.msra.mxu0 0
      %458 = vmatprep.subr.bf16.mxu0 0
      %459 = vmatpush1.bf16.msra.mxu0 0
      %460 = vmatprep.subr.bf16.mxu0 0
      %461 = vmatpush1.bf16.msra.mxu0 0
      %462 = vmatprep.subr.bf16.mxu0 0
      %463 = vmatpush1.bf16.msra.mxu0 0
      %464 = vmatprep.subr.bf16.mxu0 0
      %465 = vmatpush1.bf16.msra.mxu0 0
      %466 = vmatprep.subr.bf16.mxu0 0
      %467 = vmatpush1.bf16.msra.mxu0 0
      %468 = vmatprep.subr.bf16.mxu0 0
      %469 = vmatpush1.bf16.msra.mxu0 0
      %470 = vmatprep.mubr.bf16.mxu0 0
      %471 = vmatmul.mubr.bf16.gmra.mrb[0].mxu0 %v273
      %v472 = vpop.f32.mrb[0].mxu0
      %v473 = vadd.f32 0.0, %v472
      %v474 = vpop.f32.mrb[0].mxu0
      %v475 = vpop.f32.mrb[0].mxu0
      %v476 = vadd.f32 0.0, %v475
      %v477 = vpop.f32.mrb[0].mxu0
      %478 = vmatprep.mubr.bf16.mxu0 0
      %479 = vmatmul.mubr.bf16.gmra.mrb[0].mxu0 %v276
      %v480 = vpop.f32.mrb[0].mxu0
      %v481 = vadd.f32 0.0, %v480
      %v482 = vpop.f32.mrb[0].mxu0
      %v483 = vpop.f32.mrb[0].mxu0
      %v484 = vadd.f32 0.0, %v483
      %v485 = vpop.f32.mrb[0].mxu0
      %486 = vmatprep.mubr.bf16.mxu0 0
      %487 = vmatmul.mubr.bf16.gmra.mrb[0].mxu0 %v279
      %v488 = vpop.f32.mrb[0].mxu0
      %v489 = vadd.f32 0.0, %v488
      %v490 = vpop.f32.mrb[0].mxu0
      %v491 = vpop.f32.mrb[0].mxu0
      %v492 = vadd.f32 0.0, %v491
      %v493 = vpop.f32.mrb[0].mxu0
      %494 = vmatprep.mubr.bf16.mxu0 0
      %495 = vmatmul.mubr.bf16.gmra.mrb[0].mxu0 %v282
      %v496 = vpop.f32.mrb[0].mxu0
      %v497 = vadd.f32 0.0, %v496
      %v498 = vpop.f32.mrb[0].mxu0
      %v499 = vpop.f32.mrb[0].mxu0
      %v500 = vadd.f32 0.0, %v499
      %v501 = vpop.f32.mrb[0].mxu0
      %502 = vdwg.mxu0
      %v507 = vunpack.c.l.b16 %v223
      %v508 = vunpack.c.l.b16 %v224
      %v509 = vunpack.c.l.b16 %v225
      %v510 = vunpack.c.l.b16 %v226
      %v511 = vpack.c.b16 %v508, %v507
      %v512 = vpack.c.b16 %v510, %v509
      %515 = vmatprep.subr.bf16.mxu0 0
      %516 = vmatpush1.bf16.msra.mxu0 %v511
      %517 = vmatprep.subr.bf16.mxu0 0
      %518 = vmatpush1.bf16.msra.mxu0 %v512
      %519 = vmatprep.subr.bf16.mxu0 0
      %520 = vmatpush1.bf16.msra.mxu0 0
      %521 = vmatprep.subr.bf16.mxu0 0
      %522 = vmatpush1.bf16.msra.mxu0 0
      %523 = vmatprep.subr.bf16.mxu0 0
      %524 = vmatpush1.bf16.msra.mxu0 0
      %525 = vmatprep.subr.bf16.mxu0 0
      %526 = vmatpush1.bf16.msra.mxu0 0
      %527 = vmatprep.subr.bf16.mxu0 0
      %528 = vmatpush1.bf16.msra.mxu0 0
      %529 = vmatprep.subr.bf16.mxu0 0
      %530 = vmatpush1.bf16.msra.mxu0 0
      %531 = vmatprep.subr.bf16.mxu0 0
      %532 = vmatpush1.bf16.msra.mxu0 0
      %533 = vmatprep.subr.bf16.mxu0 0
      %534 = vmatpush1.bf16.msra.mxu0 0
      %535 = vmatprep.subr.bf16.mxu0 0
      %536 = vmatpush1.bf16.msra.mxu0 0
      %537 = vmatprep.subr.bf16.mxu0 0
      %538 = vmatpush1.bf16.msra.mxu0 0
      %539 = vmatprep.subr.bf16.mxu0 0
      %540 = vmatpush1.bf16.msra.mxu0 0
      %541 = vmatprep.subr.bf16.mxu0 0
      %542 = vmatpush1.bf16.msra.mxu0 0
      %543 = vmatprep.subr.bf16.mxu0 0
      %544 = vmatpush1.bf16.msra.mxu0 0
      %545 = vmatprep.subr.bf16.mxu0 0
      %546 = vmatpush1.bf16.msra.mxu0 0
      %547 = vmatprep.mubr.bf16.mxu0 0
      %548 = vmatmul.mubr.bf16.gmra.mrb[0].mxu0 %v273
      %v549 = vpop.f32.mrb[0].mxu0
      %v550 = vadd.f32 0.0, %v549
      %v551 = vpop.f32.mrb[0].mxu0
      %v552 = vpop.f32.mrb[0].mxu0
      %v553 = vadd.f32 0.0, %v552
      %v554 = vpop.f32.mrb[0].mxu0
      %555 = vmatprep.mubr.bf16.mxu0 0
      %556 = vmatmul.mubr.bf16.gmra.mrb[0].mxu0 %v276
      %v557 = vpop.f32.mrb[0].mxu0
      %v558 = vadd.f32 0.0, %v557
      %v559 = vpop.f32.mrb[0].mxu0
      %v560 = vpop.f32.mrb[0].mxu0
      %v561 = vadd.f32 0.0, %v560
      %v562 = vpop.f32.mrb[0].mxu0
      %563 = vmatprep.mubr.bf16.mxu0 0
      %564 = vmatmul.mubr.bf16.gmra.mrb[0].mxu0 %v279
      %v565 = vpop.f32.mrb[0].mxu0
      %v566 = vadd.f32 0.0, %v565
      %v567 = vpop.f32.mrb[0].mxu0
      %v568 = vpop.f32.mrb[0].mxu0
      %v569 = vadd.f32 0.0, %v568
      %v570 = vpop.f32.mrb[0].mxu0
      %571 = vmatprep.mubr.bf16.mxu0 0
      %572 = vmatmul.mubr.bf16.gmra.mrb[0].mxu0 %v282
      %v573 = vpop.f32.mrb[0].mxu0
      %v574 = vadd.f32 0.0, %v573
      %v575 = vpop.f32.mrb[0].mxu0
      %v576 = vpop.f32.mrb[0].mxu0
      %v577 = vadd.f32 0.0, %v576
      %v578 = vpop.f32.mrb[0].mxu0
      %579 = vdwg.mxu0
      %v584 = vunpack.c.l.b16 %v227
      %v585 = vunpack.c.l.b16 %v228
      %v586 = vunpack.c.l.b16 %v229
      %v587 = vunpack.c.l.b16 %v230
      %v588 = vpack.c.b16 %v585, %v584
      %v589 = vpack.c.b16 %v587, %v586
      %592 = vmatprep.subr.bf16.mxu0 0
      %593 = vmatpush1.bf16.msra.mxu0 %v588
      %594 = vmatprep.subr.bf16.mxu0 0
      %595 = vmatpush1.bf16.msra.mxu0 %v589
      %596 = vmatprep.subr.bf16.mxu0 0
      %597 = vmatpush1.bf16.msra.mxu0 0
      %598 = vmatprep.subr.bf16.mxu0 0
      %599 = vmatpush1.bf16.msra.mxu0 0
      %600 = vmatprep.subr.bf16.mxu0 0
      %601 = vmatpush1.bf16.msra.mxu0 0
      %602 = vmatprep.subr.bf16.mxu0 0
      %603 = vmatpush1.bf16.msra.mxu0 0
      %604 = vmatprep.subr.bf16.mxu0 0
      %605 = vmatpush1.bf16.msra.mxu0 0
      %606 = vmatprep.subr.bf16.mxu0 0
      %607 = vmatpush1.bf16.msra.mxu0 0
      %608 = vmatprep.subr.bf16.mxu0 0
      %609 = vmatpush1.bf16.msra.mxu0 0
      %610 = vmatprep.subr.bf16.mxu0 0
      %611 = vmatpush1.bf16.msra.mxu0 0
      %612 = vmatprep.subr.bf16.mxu0 0
      %613 = vmatpush1.bf16.msra.mxu0 0
      %614 = vmatprep.subr.bf16.mxu0 0
      %615 = vmatpush1.bf16.msra.mxu0 0
      %616 = vmatprep.subr.bf16.mxu0 0
      %617 = vmatpush1.bf16.msra.mxu0 0
      %618 = vmatprep.subr.bf16.mxu0 0
      %619 = vmatpush1.bf16.msra.mxu0 0
      %620 = vmatprep.subr.bf16.mxu0 0
      %621 = vmatpush1.bf16.msra.mxu0 0
      %622 = vmatprep.subr.bf16.mxu0 0
      %623 = vmatpush1.bf16.msra.mxu0 0
      %624 = vmatprep.mubr.bf16.mxu0 0
      %625 = vmatmul.mubr.bf16.gmra.mrb[0].mxu0 %v273
      %v626 = vpop.f32.mrb[0].mxu0
      %v627 = vadd.f32 0.0, %v626
      %v628 = vpop.f32.mrb[0].mxu0
      %v629 = vpop.f32.mrb[0].mxu0
      %v630 = vadd.f32 0.0, %v629
      %v631 = vpop.f32.mrb[0].mxu0
      %632 = vmatprep.mubr.bf16.mxu0 0
      %633 = vmatmul.mubr.bf16.gmra.mrb[0].mxu0 %v276
      %v634 = vpop.f32.mrb[0].mxu0
      %v635 = vadd.f32 0.0, %v634
      %v636 = vpop.f32.mrb[0].mxu0
      %v637 = vpop.f32.mrb[0].mxu0
      %v638 = vadd.f32 0.0, %v637
      %v639 = vpop.f32.mrb[0].mxu0
      %640 = vmatprep.mubr.bf16.mxu0 0
      %641 = vmatmul.mubr.bf16.gmra.mrb[0].mxu0 %v279
      %v642 = vpop.f32.mrb[0].mxu0
      %v643 = vadd.f32 0.0, %v642
      %v644 = vpop.f32.mrb[0].mxu0
      %v645 = vpop.f32.mrb[0].mxu0
      %v646 = vadd.f32 0.0, %v645
      %v647 = vpop.f32.mrb[0].mxu0
      %648 = vmatprep.mubr.bf16.mxu0 0
      %649 = vmatmul.mubr.bf16.gmra.mrb[0].mxu0 %v282
      %v650 = vpop.f32.mrb[0].mxu0
      %v651 = vadd.f32 0.0, %v650
      %v652 = vpop.f32.mrb[0].mxu0
      %v653 = vpop.f32.mrb[0].mxu0
      %v654 = vadd.f32 0.0, %v653
      %v655 = vpop.f32.mrb[0].mxu0
      %656 = vdwg.mxu0
      %v661 = vunpack.c.l.b16 %v231
      %v662 = vunpack.c.l.b16 %v232
      %v663 = vunpack.c.l.b16 %v233
      %v664 = vunpack.c.l.b16 %v234
      %v665 = vpack.c.b16 %v662, %v661
      %v666 = vpack.c.b16 %v664, %v663
      %669 = vmatprep.subr.bf16.mxu0 0
      %670 = vmatpush1.bf16.msra.mxu0 %v665
      %671 = vmatprep.subr.bf16.mxu0 0
      %672 = vmatpush1.bf16.msra.mxu0 %v666
      %673 = vmatprep.subr.bf16.mxu0 0
      %674 = vmatpush1.bf16.msra.mxu0 0
      %675 = vmatprep.subr.bf16.mxu0 0
      %676 = vmatpush1.bf16.msra.mxu0 0
      %677 = vmatprep.subr.bf16.mxu0 0
      %678 = vmatpush1.bf16.msra.mxu0 0
      %679 = vmatprep.subr.bf16.mxu0 0
      %680 = vmatpush1.bf16.msra.mxu0 0
      %681 = vmatprep.subr.bf16.mxu0 0
      %682 = vmatpush1.bf16.msra.mxu0 0
      %683 = vmatprep.subr.bf16.mxu0 0
      %684 = vmatpush1.bf16.msra.mxu0 0
      %685 = vmatprep.subr.bf16.mxu0 0
      %686 = vmatpush1.bf16.msra.mxu0 0
      %687 = vmatprep.subr.bf16.mxu0 0
      %688 = vmatpush1.bf16.msra.mxu0 0
      %689 = vmatprep.subr.bf16.mxu0 0
      %690 = vmatpush1.bf16.msra.mxu0 0
      %691 = vmatprep.subr.bf16.mxu0 0
      %692 = vmatpush1.bf16.msra.mxu0 0
      %693 = vmatprep.subr.bf16.mxu0 0
      %694 = vmatpush1.bf16.msra.mxu0 0
      %695 = vmatprep.subr.bf16.mxu0 0
      %696 = vmatpush1.bf16.msra.mxu0 0
      %697 = vmatprep.subr.bf16.mxu0 0
      %698 = vmatpush1.bf16.msra.mxu0 0
      %699 = vmatprep.subr.bf16.mxu0 0
      %700 = vmatpush1.bf16.msra.mxu0 0
      %701 = vmatprep.mubr.bf16.mxu0 0
      %702 = vmatmul.mubr.bf16.gmra.mrb[0].mxu0 %v273
      %v703 = vpop.f32.mrb[0].mxu0
      %v704 = vadd.f32 0.0, %v703
      %v705 = vpop.f32.mrb[0].mxu0
      %v706 = vpop.f32.mrb[0].mxu0
      %v707 = vadd.f32 0.0, %v706
      %v708 = vpop.f32.mrb[0].mxu0
      %709 = vmatprep.mubr.bf16.mxu0 0
      %710 = vmatmul.mubr.bf16.gmra.mrb[0].mxu0 %v276
      %v711 = vpop.f32.mrb[0].mxu0
      %v712 = vadd.f32 0.0, %v711
      %v713 = vpop.f32.mrb[0].mxu0
      %v714 = vpop.f32.mrb[0].mxu0
      %v715 = vadd.f32 0.0, %v714
      %v716 = vpop.f32.mrb[0].mxu0
      %717 = vmatprep.mubr.bf16.mxu0 0
      %718 = vmatmul.mubr.bf16.gmra.mrb[0].mxu0 %v279
      %v719 = vpop.f32.mrb[0].mxu0
      %v720 = vadd.f32 0.0, %v719
      %v721 = vpop.f32.mrb[0].mxu0
      %v722 = vpop.f32.mrb[0].mxu0
      %v723 = vadd.f32 0.0, %v722
      %v724 = vpop.f32.mrb[0].mxu0
      %725 = vmatprep.mubr.bf16.mxu0 0
      %726 = vmatmul.mubr.bf16.gmra.mrb[0].mxu0 %v282
      %v727 = vpop.f32.mrb[0].mxu0
      %v728 = vadd.f32 0.0, %v727
      %v729 = vpop.f32.mrb[0].mxu0
      %v730 = vpop.f32.mrb[0].mxu0
      %v731 = vadd.f32 0.0, %v730
      %v732 = vpop.f32.mrb[0].mxu0
      %733 = vdwg.mxu0
      %v738 = vunpack.c.l.b16 %v235
      %v739 = vunpack.c.l.b16 %v236
      %v740 = vunpack.c.l.b16 %v237
      %v741 = vunpack.c.l.b16 %v238
      %v742 = vpack.c.b16 %v739, %v738
      %v743 = vpack.c.b16 %v741, %v740
      %746 = vmatprep.subr.bf16.mxu0 0
      %747 = vmatpush1.bf16.msra.mxu0 %v742
      %748 = vmatprep.subr.bf16.mxu0 0
      %749 = vmatpush1.bf16.msra.mxu0 %v743
      %750 = vmatprep.subr.bf16.mxu0 0
      %751 = vmatpush1.bf16.msra.mxu0 0
      %752 = vmatprep.subr.bf16.mxu0 0
      %753 = vmatpush1.bf16.msra.mxu0 0
      %754 = vmatprep.subr.bf16.mxu0 0
      %755 = vmatpush1.bf16.msra.mxu0 0
      %756 = vmatprep.subr.bf16.mxu0 0
      %757 = vmatpush1.bf16.msra.mxu0 0
      %758 = vmatprep.subr.bf16.mxu0 0
      %759 = vmatpush1.bf16.msra.mxu0 0
      %760 = vmatprep.subr.bf16.mxu0 0
      %761 = vmatpush1.bf16.msra.mxu0 0
      %762 = vmatprep.subr.bf16.mxu0 0
      %763 = vmatpush1.bf16.msra.mxu0 0
      %764 = vmatprep.subr.bf16.mxu0 0
      %765 = vmatpush1.bf16.msra.mxu0 0
      %766 = vmatprep.subr.bf16.mxu0 0
      %767 = vmatpush1.bf16.msra.mxu0 0
      %768 = vmatprep.subr.bf16.mxu0 0
      %769 = vmatpush1.bf16.msra.mxu0 0
      %770 = vmatprep.subr.bf16.mxu0 0
      %771 = vmatpush1.bf16.msra.mxu0 0
      %772 = vmatprep.subr.bf16.mxu0 0
      %773 = vmatpush1.bf16.msra.mxu0 0
      %774 = vmatprep.subr.bf16.mxu0 0
      %775 = vmatpush1.bf16.msra.mxu0 0
      %776 = vmatprep.subr.bf16.mxu0 0
      %777 = vmatpush1.bf16.msra.mxu0 0
      %778 = vmatprep.mubr.bf16.mxu0 0
      %779 = vmatmul.mubr.bf16.gmra.mrb[0].mxu0 %v273
      %v780 = vpop.f32.mrb[0].mxu0
      %v781 = vadd.f32 0.0, %v780
      %v782 = vpop.f32.mrb[0].mxu0
      %v783 = vpop.f32.mrb[0].mxu0
      %v784 = vadd.f32 0.0, %v783
      %v785 = vpop.f32.mrb[0].mxu0
      %786 = vmatprep.mubr.bf16.mxu0 0
      %787 = vmatmul.mubr.bf16.gmra.mrb[0].mxu0 %v276
      %v788 = vpop.f32.mrb[0].mxu0
      %v789 = vadd.f32 0.0, %v788
      %v790 = vpop.f32.mrb[0].mxu0
      %v791 = vpop.f32.mrb[0].mxu0
      %v792 = vadd.f32 0.0, %v791
      %v793 = vpop.f32.mrb[0].mxu0
      %794 = vmatprep.mubr.bf16.mxu0 0
      %795 = vmatmul.mubr.bf16.gmra.mrb[0].mxu0 %v279
      %v796 = vpop.f32.mrb[0].mxu0
      %v797 = vadd.f32 0.0, %v796
      %v798 = vpop.f32.mrb[0].mxu0
      %v799 = vpop.f32.mrb[0].mxu0
      %v800 = vadd.f32 0.0, %v799
      %v801 = vpop.f32.mrb[0].mxu0
      %802 = vmatprep.mubr.bf16.mxu0 0
      %803 = vmatmul.mubr.bf16.gmra.mrb[0].mxu0 %v282
      %v804 = vpop.f32.mrb[0].mxu0
      %v805 = vadd.f32 0.0, %v804
      %v806 = vpop.f32.mrb[0].mxu0
      %v807 = vpop.f32.mrb[0].mxu0
      %v808 = vadd.f32 0.0, %v807
      %v809 = vpop.f32.mrb[0].mxu0
      %810 = vdwg.mxu0
      %v815 = vunpack.c.l.b16 %v239
      %v816 = vunpack.c.l.b16 %v240
      %v817 = vunpack.c.l.b16 %v241
      %v818 = vunpack.c.l.b16 %v242
      %v819 = vpack.c.b16 %v816, %v815
      %v820 = vpack.c.b16 %v818, %v817
      %823 = vmatprep.subr.bf16.mxu0 0
      %824 = vmatpush1.bf16.msra.mxu0 %v819
      %825 = vmatprep.subr.bf16.mxu0 0
      %826 = vmatpush1.bf16.msra.mxu0 %v820
      %827 = vmatprep.subr.bf16.mxu0 0
      %828 = vmatpush1.bf16.msra.mxu0 0
      %829 = vmatprep.subr.bf16.mxu0 0
      %830 = vmatpush1.bf16.msra.mxu0 0
      %831 = vmatprep.subr.bf16.mxu0 0
      %832 = vmatpush1.bf16.msra.mxu0 0
      %833 = vmatprep.subr.bf16.mxu0 0
      %834 = vmatpush1.bf16.msra.mxu0 0
      %835 = vmatprep.subr.bf16.mxu0 0
      %836 = vmatpush1.bf16.msra.mxu0 0
      %837 = vmatprep.subr.bf16.mxu0 0
      %838 = vmatpush1.bf16.msra.mxu0 0
      %839 = vmatprep.subr.bf16.mxu0 0
      %840 = vmatpush1.bf16.msra.mxu0 0
      %841 = vmatprep.subr.bf16.mxu0 0
      %842 = vmatpush1.bf16.msra.mxu0 0
      %843 = vmatprep.subr.bf16.mxu0 0
      %844 = vmatpush1.bf16.msra.mxu0 0
      %845 = vmatprep.subr.bf16.mxu0 0
      %846 = vmatpush1.bf16.msra.mxu0 0
      %847 = vmatprep.subr.bf16.mxu0 0
      %848 = vmatpush1.bf16.msra.mxu0 0
      %849 = vmatprep.subr.bf16.mxu0 0
      %850 = vmatpush1.bf16.msra.mxu0 0
      %851 = vmatprep.subr.bf16.mxu0 0
      %852 = vmatpush1.bf16.msra.mxu0 0
      %853 = vmatprep.subr.bf16.mxu0 0
      %854 = vmatpush1.bf16.msra.mxu0 0
      %855 = vmatprep.mubr.bf16.mxu0 0
      %856 = vmatmul.mubr.bf16.gmra.mrb[0].mxu0 %v273
      %v857 = vpop.f32.mrb[0].mxu0
      %v858 = vadd.f32 0.0, %v857
      %v859 = vpop.f32.mrb[0].mxu0
      %v860 = vpop.f32.mrb[0].mxu0
      %v861 = vadd.f32 0.0, %v860
      %v862 = vpop.f32.mrb[0].mxu0
      %863 = vmatprep.mubr.bf16.mxu0 0
      %864 = vmatmul.mubr.bf16.gmra.mrb[0].mxu0 %v276
      %v865 = vpop.f32.mrb[0].mxu0
      %v866 = vadd.f32 0.0, %v865
      %v867 = vpop.f32.mrb[0].mxu0
      %v868 = vpop.f32.mrb[0].mxu0
      %v869 = vadd.f32 0.0, %v868
      %v870 = vpop.f32.mrb[0].mxu0
      %871 = vmatprep.mubr.bf16.mxu0 0
      %872 = vmatmul.mubr.bf16.gmra.mrb[0].mxu0 %v279
      %v873 = vpop.f32.mrb[0].mxu0
      %v874 = vadd.f32 0.0, %v873
      %v875 = vpop.f32.mrb[0].mxu0
      %v876 = vpop.f32.mrb[0].mxu0
      %v877 = vadd.f32 0.0, %v876
      %v878 = vpop.f32.mrb[0].mxu0
      %879 = vmatprep.mubr.bf16.mxu0 0
      %880 = vmatmul.mubr.bf16.gmra.mrb[0].mxu0 %v282
      %v881 = vpop.f32.mrb[0].mxu0
      %v882 = vadd.f32 0.0, %v881
      %v883 = vpop.f32.mrb[0].mxu0
      %v884 = vpop.f32.mrb[0].mxu0
      %v885 = vadd.f32 0.0, %v884
      %v886 = vpop.f32.mrb[0].mxu0
      %887 = vdwg.mxu0
      %v892 = vunpack.c.l.b16 %v243
      %v893 = vunpack.c.l.b16 %v244
      %v894 = vunpack.c.l.b16 %v245
      %v895 = vunpack.c.l.b16 %v246
      %v896 = vpack.c.b16 %v893, %v892
      %v897 = vpack.c.b16 %v895, %v894
      %900 = vmatprep.subr.bf16.mxu0 0
      %901 = vmatpush1.bf16.msra.mxu0 %v896
      %902 = vmatprep.subr.bf16.mxu0 0
      %903 = vmatpush1.bf16.msra.mxu0 %v897
      %904 = vmatprep.subr.bf16.mxu0 0
      %905 = vmatpush1.bf16.msra.mxu0 0
      %906 = vmatprep.subr.bf16.mxu0 0
      %907 = vmatpush1.bf16.msra.mxu0 0
      %908 = vmatprep.subr.bf16.mxu0 0
      %909 = vmatpush1.bf16.msra.mxu0 0
      %910 = vmatprep.subr.bf16.mxu0 0
      %911 = vmatpush1.bf16.msra.mxu0 0
      %912 = vmatprep.subr.bf16.mxu0 0
      %913 = vmatpush1.bf16.msra.mxu0 0
      %914 = vmatprep.subr.bf16.mxu0 0
      %915 = vmatpush1.bf16.msra.mxu0 0
      %916 = vmatprep.subr.bf16.mxu0 0
      %917 = vmatpush1.bf16.msra.mxu0 0
      %918 = vmatprep.subr.bf16.mxu0 0
      %919 = vmatpush1.bf16.msra.mxu0 0
      %920 = vmatprep.subr.bf16.mxu0 0
      %921 = vmatpush1.bf16.msra.mxu0 0
      %922 = vmatprep.subr.bf16.mxu0 0
      %923 = vmatpush1.bf16.msra.mxu0 0
      %924 = vmatprep.subr.bf16.mxu0 0
      %925 = vmatpush1.bf16.msra.mxu0 0
      %926 = vmatprep.subr.bf16.mxu0 0
      %927 = vmatpush1.bf16.msra.mxu0 0
      %928 = vmatprep.subr.bf16.mxu0 0
      %929 = vmatpush1.bf16.msra.mxu0 0
      %930 = vmatprep.subr.bf16.mxu0 0
      %931 = vmatpush1.bf16.msra.mxu0 0
      %932 = vmatprep.mubr.bf16.mxu0 0
      %933 = vmatmul.mubr.bf16.gmra.mrb[0].mxu0 %v273
      %v934 = vpop.f32.mrb[0].mxu0
      %v935 = vadd.f32 0.0, %v934
      %v936 = vpop.f32.mrb[0].mxu0
      %v937 = vpop.f32.mrb[0].mxu0
      %v938 = vadd.f32 0.0, %v937
      %v939 = vpop.f32.mrb[0].mxu0
      %940 = vmatprep.mubr.bf16.mxu0 0
      %941 = vmatmul.mubr.bf16.gmra.mrb[0].mxu0 %v276
      %v942 = vpop.f32.mrb[0].mxu0
      %v943 = vadd.f32 0.0, %v942
      %v944 = vpop.f32.mrb[0].mxu0
      %v945 = vpop.f32.mrb[0].mxu0
      %v946 = vadd.f32 0.0, %v945
      %v947 = vpop.f32.mrb[0].mxu0
      %948 = vmatprep.mubr.bf16.mxu0 0
      %949 = vmatmul.mubr.bf16.gmra.mrb[0].mxu0 %v279
      %v950 = vpop.f32.mrb[0].mxu0
      %v951 = vadd.f32 0.0, %v950
      %v952 = vpop.f32.mrb[0].mxu0
      %v953 = vpop.f32.mrb[0].mxu0
      %v954 = vadd.f32 0.0, %v953
      %v955 = vpop.f32.mrb[0].mxu0
      %956 = vmatprep.mubr.bf16.mxu0 0
      %957 = vmatmul.mubr.bf16.gmra.mrb[0].mxu0 %v282
      %v958 = vpop.f32.mrb[0].mxu0
      %v959 = vadd.f32 0.0, %v958
      %v960 = vpop.f32.mrb[0].mxu0
      %v961 = vpop.f32.mrb[0].mxu0
      %v962 = vadd.f32 0.0, %v961
      %v963 = vpop.f32.mrb[0].mxu0
      %964 = vdwg.mxu0
      %v969 = vunpack.c.l.b16 %v247
      %v970 = vunpack.c.l.b16 %v248
      %v971 = vunpack.c.l.b16 %v249
      %v972 = vunpack.c.l.b16 %v250
      %v973 = vpack.c.b16 %v970, %v969
      %v974 = vpack.c.b16 %v972, %v971
      %977 = vmatprep.subr.bf16.mxu0 0
      %978 = vmatpush1.bf16.msra.mxu0 %v973
      %979 = vmatprep.subr.bf16.mxu0 0
      %980 = vmatpush1.bf16.msra.mxu0 %v974
      %981 = vmatprep.subr.bf16.mxu0 0
      %982 = vmatpush1.bf16.msra.mxu0 0
      %983 = vmatprep.subr.bf16.mxu0 0
      %984 = vmatpush1.bf16.msra.mxu0 0
      %985 = vmatprep.subr.bf16.mxu0 0
      %986 = vmatpush1.bf16.msra.mxu0 0
      %987 = vmatprep.subr.bf16.mxu0 0
      %988 = vmatpush1.bf16.msra.mxu0 0
      %989 = vmatprep.subr.bf16.mxu0 0
      %990 = vmatpush1.bf16.msra.mxu0 0
      %991 = vmatprep.subr.bf16.mxu0 0
      %992 = vmatpush1.bf16.msra.mxu0 0
      %993 = vmatprep.subr.bf16.mxu0 0
      %994 = vmatpush1.bf16.msra.mxu0 0
      %995 = vmatprep.subr.bf16.mxu0 0
      %996 = vmatpush1.bf16.msra.mxu0 0
      %997 = vmatprep.subr.bf16.mxu0 0
      %998 = vmatpush1.bf16.msra.mxu0 0
      %999 = vmatprep.subr.bf16.mxu0 0
      %1000 = vmatpush1.bf16.msra.mxu0 0
      %1001 = vmatprep.subr.bf16.mxu0 0
      %1002 = vmatpush1.bf16.msra.mxu0 0
      %1003 = vmatprep.subr.bf16.mxu0 0
      %1004 = vmatpush1.bf16.msra.mxu0 0
      %1005 = vmatprep.subr.bf16.mxu0 0
      %1006 = vmatpush1.bf16.msra.mxu0 0
      %1007 = vmatprep.subr.bf16.mxu0 0
      %1008 = vmatpush1.bf16.msra.mxu0 0
      %1009 = vmatprep.mubr.bf16.mxu0 0
      %1010 = vmatmul.mubr.bf16.gmra.mrb[0].mxu0 %v273
      %v1011 = vpop.f32.mrb[0].mxu0
      %v1012 = vadd.f32 0.0, %v1011
      %v1013 = vpop.f32.mrb[0].mxu0
      %v1014 = vpop.f32.mrb[0].mxu0
      %v1015 = vadd.f32 0.0, %v1014
      %v1016 = vpop.f32.mrb[0].mxu0
      %1017 = vmatprep.mubr.bf16.mxu0 0
      %1018 = vmatmul.mubr.bf16.gmra.mrb[0].mxu0 %v276
      %v1019 = vpop.f32.mrb[0].mxu0
      %v1020 = vadd.f32 0.0, %v1019
      %v1021 = vpop.f32.mrb[0].mxu0
      %v1022 = vpop.f32.mrb[0].mxu0
      %v1023 = vadd.f32 0.0, %v1022
      %v1024 = vpop.f32.mrb[0].mxu0
      %1025 = vmatprep.mubr.bf16.mxu0 0
      %1026 = vmatmul.mubr.bf16.gmra.mrb[0].mxu0 %v279
      %v1027 = vpop.f32.mrb[0].mxu0
      %v1028 = vadd.f32 0.0, %v1027
      %v1029 = vpop.f32.mrb[0].mxu0
      %v1030 = vpop.f32.mrb[0].mxu0
      %v1031 = vadd.f32 0.0, %v1030
      %v1032 = vpop.f32.mrb[0].mxu0
      %1033 = vmatprep.mubr.bf16.mxu0 0
      %1034 = vmatmul.mubr.bf16.gmra.mrb[0].mxu0 %v282
      %v1035 = vpop.f32.mrb[0].mxu0
      %v1036 = vadd.f32 0.0, %v1035
      %v1037 = vpop.f32.mrb[0].mxu0
      %v1038 = vpop.f32.mrb[0].mxu0
      %v1039 = vadd.f32 0.0, %v1038
      %v1040 = vpop.f32.mrb[0].mxu0
      %1041 = vdwg.mxu0
      %v1046 = vunpack.c.l.b16 %v251
      %v1047 = vunpack.c.l.b16 %v252
      %v1048 = vunpack.c.l.b16 %v253
      %v1049 = vunpack.c.l.b16 %v254
      %v1050 = vpack.c.b16 %v1047, %v1046
      %v1051 = vpack.c.b16 %v1049, %v1048
      %1054 = vmatprep.subr.bf16.mxu0 0
      %1055 = vmatpush1.bf16.msra.mxu0 %v1050
      %1056 = vmatprep.subr.bf16.mxu0 0
      %1057 = vmatpush1.bf16.msra.mxu0 %v1051
      %1058 = vmatprep.subr.bf16.mxu0 0
      %1059 = vmatpush1.bf16.msra.mxu0 0
      %1060 = vmatprep.subr.bf16.mxu0 0
      %1061 = vmatpush1.bf16.msra.mxu0 0
      %1062 = vmatprep.subr.bf16.mxu0 0
      %1063 = vmatpush1.bf16.msra.mxu0 0
      %1064 = vmatprep.subr.bf16.mxu0 0
      %1065 = vmatpush1.bf16.msra.mxu0 0
      %1066 = vmatprep.subr.bf16.mxu0 0
      %1067 = vmatpush1.bf16.msra.mxu0 0
      %1068 = vmatprep.subr.bf16.mxu0 0
      %1069 = vmatpush1.bf16.msra.mxu0 0
      %1070 = vmatprep.subr.bf16.mxu0 0
      %1071 = vmatpush1.bf16.msra.mxu0 0
      %1072 = vmatprep.subr.bf16.mxu0 0
      %1073 = vmatpush1.bf16.msra.mxu0 0
      %1074 = vmatprep.subr.bf16.mxu0 0
      %1075 = vmatpush1.bf16.msra.mxu0 0
      %1076 = vmatprep.subr.bf16.mxu0 0
      %1077 = vmatpush1.bf16.msra.mxu0 0
      %1078 = vmatprep.subr.bf16.mxu0 0
      %1079 = vmatpush1.bf16.msra.mxu0 0
      %1080 = vmatprep.subr.bf16.mxu0 0
      %1081 = vmatpush1.bf16.msra.mxu0 0
      %1082 = vmatprep.subr.bf16.mxu0 0
      %1083 = vmatpush1.bf16.msra.mxu0 0
      %1084 = vmatprep.subr.bf16.mxu0 0
      %1085 = vmatpush1.bf16.msra.mxu0 0
      %1086 = vmatprep.mubr.bf16.mxu0 0
      %1087 = vmatmul.mubr.bf16.gmra.mrb[0].mxu0 %v273
      %v1088 = vpop.f32.mrb[0].mxu0
      %v1089 = vadd.f32 0.0, %v1088
      %v1090 = vpop.f32.mrb[0].mxu0
      %v1091 = vpop.f32.mrb[0].mxu0
      %v1092 = vadd.f32 0.0, %v1091
      %v1093 = vpop.f32.mrb[0].mxu0
      %1094 = vmatprep.mubr.bf16.mxu0 0
      %1095 = vmatmul.mubr.bf16.gmra.mrb[0].mxu0 %v276
      %v1096 = vpop.f32.mrb[0].mxu0
      %v1097 = vadd.f32 0.0, %v1096
      %v1098 = vpop.f32.mrb[0].mxu0
      %v1099 = vpop.f32.mrb[0].mxu0
      %v1100 = vadd.f32 0.0, %v1099
      %v1101 = vpop.f32.mrb[0].mxu0
      %1102 = vmatprep.mubr.bf16.mxu0 0
      %1103 = vmatmul.mubr.bf16.gmra.mrb[0].mxu0 %v279
      %v1104 = vpop.f32.mrb[0].mxu0
      %v1105 = vadd.f32 0.0, %v1104
      %v1106 = vpop.f32.mrb[0].mxu0
      %v1107 = vpop.f32.mrb[0].mxu0
      %v1108 = vadd.f32 0.0, %v1107
      %v1109 = vpop.f32.mrb[0].mxu0
      %1110 = vmatprep.mubr.bf16.mxu0 0
      %1111 = vmatmul.mubr.bf16.gmra.mrb[0].mxu0 %v282
      %v1112 = vpop.f32.mrb[0].mxu0
      %v1113 = vadd.f32 0.0, %v1112
      %v1114 = vpop.f32.mrb[0].mxu0
      %v1115 = vpop.f32.mrb[0].mxu0
      %v1116 = vadd.f32 0.0, %v1115
      %v1117 = vpop.f32.mrb[0].mxu0
      %1118 = vdwg.mxu0
      %v1123 = vunpack.c.l.b16 %v255
      %v1124 = vunpack.c.l.b16 %v256
      %v1125 = vunpack.c.l.b16 %v257
      %v1126 = vunpack.c.l.b16 %v258
      %v1127 = vpack.c.b16 %v1124, %v1123
      %v1128 = vpack.c.b16 %v1126, %v1125
      %1131 = vmatprep.subr.bf16.mxu0 0
      %1132 = vmatpush1.bf16.msra.mxu0 %v1127
      %1133 = vmatprep.subr.bf16.mxu0 0
      %1134 = vmatpush1.bf16.msra.mxu0 %v1128
      %1135 = vmatprep.subr.bf16.mxu0 0
      %1136 = vmatpush1.bf16.msra.mxu0 0
      %1137 = vmatprep.subr.bf16.mxu0 0
      %1138 = vmatpush1.bf16.msra.mxu0 0
      %1139 = vmatprep.subr.bf16.mxu0 0
      %1140 = vmatpush1.bf16.msra.mxu0 0
      %1141 = vmatprep.subr.bf16.mxu0 0
      %1142 = vmatpush1.bf16.msra.mxu0 0
      %1143 = vmatprep.subr.bf16.mxu0 0
      %1144 = vmatpush1.bf16.msra.mxu0 0
      %1145 = vmatprep.subr.bf16.mxu0 0
      %1146 = vmatpush1.bf16.msra.mxu0 0
      %1147 = vmatprep.subr.bf16.mxu0 0
      %1148 = vmatpush1.bf16.msra.mxu0 0
      %1149 = vmatprep.subr.bf16.mxu0 0
      %1150 = vmatpush1.bf16.msra.mxu0 0
      %1151 = vmatprep.subr.bf16.mxu0 0
      %1152 = vmatpush1.bf16.msra.mxu0 0
      %1153 = vmatprep.subr.bf16.mxu0 0
      %1154 = vmatpush1.bf16.msra.mxu0 0
      %1155 = vmatprep.subr.bf16.mxu0 0
      %1156 = vmatpush1.bf16.msra.mxu0 0
      %1157 = vmatprep.subr.bf16.mxu0 0
      %1158 = vmatpush1.bf16.msra.mxu0 0
      %1159 = vmatprep.subr.bf16.mxu0 0
      %1160 = vmatpush1.bf16.msra.mxu0 0
      %1161 = vmatprep.subr.bf16.mxu0 0
      %1162 = vmatpush1.bf16.msra.mxu0 0
      %1163 = vmatprep.mubr.bf16.mxu0 0
      %1164 = vmatmul.mubr.bf16.gmra.mrb[0].mxu0 %v273
      %v1165 = vpop.f32.mrb[0].mxu0
      %v1166 = vadd.f32 0.0, %v1165
      %v1167 = vpop.f32.mrb[0].mxu0
      %v1168 = vpop.f32.mrb[0].mxu0
      %v1169 = vadd.f32 0.0, %v1168
      %v1170 = vpop.f32.mrb[0].mxu0
      %1171 = vmatprep.mubr.bf16.mxu0 0
      %1172 = vmatmul.mubr.bf16.gmra.mrb[0].mxu0 %v276
      %v1173 = vpop.f32.mrb[0].mxu0
      %v1174 = vadd.f32 0.0, %v1173
      %v1175 = vpop.f32.mrb[0].mxu0
      %v1176 = vpop.f32.mrb[0].mxu0
      %v1177 = vadd.f32 0.0, %v1176
      %v1178 = vpop.f32.mrb[0].mxu0
      %1179 = vmatprep.mubr.bf16.mxu0 0
      %1180 = vmatmul.mubr.bf16.gmra.mrb[0].mxu0 %v279
      %v1181 = vpop.f32.mrb[0].mxu0
      %v1182 = vadd.f32 0.0, %v1181
      %v1183 = vpop.f32.mrb[0].mxu0
      %v1184 = vpop.f32.mrb[0].mxu0
      %v1185 = vadd.f32 0.0, %v1184
      %v1186 = vpop.f32.mrb[0].mxu0
      %1187 = vmatprep.mubr.bf16.mxu0 0
      %1188 = vmatmul.mubr.bf16.gmra.mrb[0].mxu0 %v282
      %v1189 = vpop.f32.mrb[0].mxu0
      %v1190 = vadd.f32 0.0, %v1189
      %v1191 = vpop.f32.mrb[0].mxu0
      %v1192 = vpop.f32.mrb[0].mxu0
      %v1193 = vadd.f32 0.0, %v1192
      %v1194 = vpop.f32.mrb[0].mxu0
      %1195 = vdwg.mxu0
      %v1196 = vpack.c.bf16 %v322, %v319
      %v1197 = vpack.c.bf16 %v330, %v327
      %v1198 = vpack.c.bf16 %v338, %v335
      %v1199 = vpack.c.bf16 %v346, %v343
      %v1200 = vpack.c.bf16 %v399, %v396
      %v1201 = vpack.c.bf16 %v407, %v404
      %v1202 = vpack.c.bf16 %v415, %v412
      %v1203 = vpack.c.bf16 %v423, %v420
      %v1204 = vpack.c.bf16 %v476, %v473
      %v1205 = vpack.c.bf16 %v484, %v481
      %v1206 = vpack.c.bf16 %v492, %v489
      %v1207 = vpack.c.bf16 %v500, %v497
      %v1208 = vpack.c.bf16 %v553, %v550
      %v1209 = vpack.c.bf16 %v561, %v558
      %v1210 = vpack.c.bf16 %v569, %v566
      %v1211 = vpack.c.bf16 %v577, %v574
      %v1212 = vpack.c.bf16 %v630, %v627
      %v1213 = vpack.c.bf16 %v638, %v635
      %v1214 = vpack.c.bf16 %v646, %v643
      %v1215 = vpack.c.bf16 %v654, %v651
      %v1216 = vpack.c.bf16 %v707, %v704
      %v1217 = vpack.c.bf16 %v715, %v712
      %v1218 = vpack.c.bf16 %v723, %v720
      %v1219 = vpack.c.bf16 %v731, %v728
      %v1220 = vpack.c.bf16 %v784, %v781
      %v1221 = vpack.c.bf16 %v792, %v789
      %v1222 = vpack.c.bf16 %v800, %v797
      %v1223 = vpack.c.bf16 %v808, %v805
      %v1224 = vpack.c.bf16 %v861, %v858
      %v1225 = vpack.c.bf16 %v869, %v866
      %v1226 = vpack.c.bf16 %v877, %v874
      %v1227 = vpack.c.bf16 %v885, %v882
      %v1228 = vpack.c.bf16 %v938, %v935
      %v1229 = vpack.c.bf16 %v946, %v943
      %v1230 = vpack.c.bf16 %v954, %v951
      %v1231 = vpack.c.bf16 %v962, %v959
      %v1232 = vpack.c.bf16 %v1015, %v1012
      %v1233 = vpack.c.bf16 %v1023, %v1020
      %v1234 = vpack.c.bf16 %v1031, %v1028
      %v1235 = vpack.c.bf16 %v1039, %v1036
      %v1236 = vpack.c.bf16 %v1092, %v1089
      %v1237 = vpack.c.bf16 %v1100, %v1097
      %v1238 = vpack.c.bf16 %v1108, %v1105
      %v1239 = vpack.c.bf16 %v1116, %v1113
      %v1240 = vpack.c.bf16 %v1169, %v1166
      %v1241 = vpack.c.bf16 %v1177, %v1174
      %v1242 = vpack.c.bf16 %v1185, %v1182
      %v1243 = vpack.c.bf16 %v1193, %v1190
      %vm1244 = vcmask 130048
      %v1246 = vsel %vm1244, %v1196, 0
      %v1249 = vsel %vm1244, %v1197, 0
      %v1252 = vsel %vm1244, %v1198, 0
      %v1255 = vsel %vm1244, %v1199, 0
      %v1258 = vsel %vm1244, %v1212, 0
      %v1261 = vsel %vm1244, %v1213, 0
      %v1264 = vsel %vm1244, %v1214, 0
      %v1267 = vsel %vm1244, %v1215, 0
      %1269 = vmatprep.subr.bf16.mxu0 0
      %1270 = vmatpush1.bf16.xpose.msra.mxu0 %v1258
      %1271 = vmatprep.subr.bf16.mxu0 0
      %1272 = vmatpush1.bf16.xpose.msra.mxu0 %v1261
      %1273 = vmatprep.subr.bf16.mxu0 0
      %1274 = vmatpush1.bf16.xpose.msra.mxu0 %v1264
      %1275 = vmatprep.subr.bf16.mxu0 0
      %1276 = vmatpush1.bf16.xpose.msra.mxu0 %v1267
      %1277 = vmatprep.subr.bf16.mxu0 0
      %1278 = vmatpush1.bf16.xpose.msra.mxu0 0
      %1279 = vmatprep.subr.bf16.mxu0 0
      %1280 = vmatpush1.bf16.xpose.msra.mxu0 0
      %1281 = vmatprep.subr.bf16.mxu0 0
      %1282 = vmatpush1.bf16.xpose.msra.mxu0 0
      %1283 = vmatprep.subr.bf16.mxu0 0
      %1284 = vmatpush1.bf16.xpose.msra.mxu0 0
      %1285 = vmatprep.subr.bf16.mxu0 0
      %1286 = vmatpush1.bf16.xpose.msra.mxu0 0
      %1287 = vmatprep.subr.bf16.mxu0 0
      %1288 = vmatpush1.bf16.xpose.msra.mxu0 0
      %1289 = vmatprep.subr.bf16.mxu0 0
      %1290 = vmatpush1.bf16.xpose.msra.mxu0 0
      %1291 = vmatprep.subr.bf16.mxu0 0
      %1292 = vmatpush1.bf16.xpose.msra.mxu0 0
      %1293 = vmatprep.subr.bf16.mxu0 0
      %1294 = vmatpush1.bf16.xpose.msra.mxu0 0
      %1295 = vmatprep.subr.bf16.mxu0 0
      %1296 = vmatpush1.bf16.xpose.msra.mxu0 0
      %1297 = vmatprep.subr.bf16.mxu0 0
      %1298 = vmatpush1.bf16.xpose.msra.mxu0 0
      %1299 = vmatprep.subr.bf16.mxu0 0
      %1300 = vmatpush1.bf16.xpose.msra.mxu0 0
      %1301 = vmatprep.mubr.bf16.mxu0 0
      %1302 = vmatmul.mubr.bf16.gmra.mrb[0].mxu0 %v1246
      %v1303 = vpop.f32.mrb[0].mxu0
      %v1304 = vadd.f32 0.0, %v1303
      %v1305 = vpop.f32.mrb[0].mxu0
      %v1306 = vpop.f32.mrb[0].mxu0
      %v1307 = vadd.f32 0.0, %v1306
      %v1308 = vpop.f32.mrb[0].mxu0
      %1309 = vmatprep.mubr.bf16.mxu0 0
      %1310 = vmatmul.mubr.bf16.gmra.mrb[0].mxu0 %v1249
      %v1311 = vpop.f32.mrb[0].mxu0
      %v1312 = vadd.f32 0.0, %v1311
      %v1313 = vpop.f32.mrb[0].mxu0
      %v1314 = vpop.f32.mrb[0].mxu0
      %v1315 = vadd.f32 0.0, %v1314
      %v1316 = vpop.f32.mrb[0].mxu0
      %1317 = vmatprep.mubr.bf16.mxu0 0
      %1318 = vmatmul.mubr.bf16.gmra.mrb[0].mxu0 %v1252
      %v1319 = vpop.f32.mrb[0].mxu0
      %v1320 = vadd.f32 0.0, %v1319
      %v1321 = vpop.f32.mrb[0].mxu0
      %v1322 = vpop.f32.mrb[0].mxu0
      %v1323 = vadd.f32 0.0, %v1322
      %v1324 = vpop.f32.mrb[0].mxu0
      %1325 = vmatprep.mubr.bf16.mxu0 0
      %1326 = vmatmul.mubr.bf16.gmra.mrb[0].mxu0 %v1255
      %v1327 = vpop.f32.mrb[0].mxu0
      %v1328 = vadd.f32 0.0, %v1327
      %v1329 = vpop.f32.mrb[0].mxu0
      %v1330 = vpop.f32.mrb[0].mxu0
      %v1331 = vadd.f32 0.0, %v1330
      %v1332 = vpop.f32.mrb[0].mxu0
      %1333 = vdwg.mxu0
      %v1335 = vsel %vm1244, %v1200, 0
      %v1338 = vsel %vm1244, %v1201, 0
      %v1341 = vsel %vm1244, %v1202, 0
      %v1344 = vsel %vm1244, %v1203, 0
      %v1347 = vsel %vm1244, %v1216, 0
      %v1350 = vsel %vm1244, %v1217, 0
      %v1353 = vsel %vm1244, %v1218, 0
      %v1356 = vsel %vm1244, %v1219, 0
      %1358 = vmatprep.subr.bf16.mxu0 0
      %1359 = vmatpush1.bf16.xpose.msra.mxu0 %v1347
      %1360 = vmatprep.subr.bf16.mxu0 0
      %1361 = vmatpush1.bf16.xpose.msra.mxu0 %v1350
      %1362 = vmatprep.subr.bf16.mxu0 0
      %1363 = vmatpush1.bf16.xpose.msra.mxu0 %v1353
      %1364 = vmatprep.subr.bf16.mxu0 0
      %1365 = vmatpush1.bf16.xpose.msra.mxu0 %v1356
      %1366 = vmatprep.subr.bf16.mxu0 0
      %1367 = vmatpush1.bf16.xpose.msra.mxu0 0
      %1368 = vmatprep.subr.bf16.mxu0 0
      %1369 = vmatpush1.bf16.xpose.msra.mxu0 0
      %1370 = vmatprep.subr.bf16.mxu0 0
      %1371 = vmatpush1.bf16.xpose.msra.mxu0 0
      %1372 = vmatprep.subr.bf16.mxu0 0
      %1373 = vmatpush1.bf16.xpose.msra.mxu0 0
      %1374 = vmatprep.subr.bf16.mxu0 0
      %1375 = vmatpush1.bf16.xpose.msra.mxu0 0
      %1376 = vmatprep.subr.bf16.mxu0 0
      %1377 = vmatpush1.bf16.xpose.msra.mxu0 0
      %1378 = vmatprep.subr.bf16.mxu0 0
      %1379 = vmatpush1.bf16.xpose.msra.mxu0 0
      %1380 = vmatprep.subr.bf16.mxu0 0
      %1381 = vmatpush1.bf16.xpose.msra.mxu0 0
      %1382 = vmatprep.subr.bf16.mxu0 0
      %1383 = vmatpush1.bf16.xpose.msra.mxu0 0
      %1384 = vmatprep.subr.bf16.mxu0 0
      %1385 = vmatpush1.bf16.xpose.msra.mxu0 0
      %1386 = vmatprep.subr.bf16.mxu0 0
      %1387 = vmatpush1.bf16.xpose.msra.mxu0 0
      %1388 = vmatprep.subr.bf16.mxu0 0
      %1389 = vmatpush1.bf16.xpose.msra.mxu0 0
      %1390 = vmatprep.mubr.bf16.mxu0 0
      %1391 = vmatmul.mubr.bf16.gmra.mrb[0].mxu0 %v1335
      %v1392 = vpop.f32.mrb[0].mxu0
      %v1393 = vadd.f32 0.0, %v1392
      %v1394 = vpop.f32.mrb[0].mxu0
      %v1395 = vpop.f32.mrb[0].mxu0
      %v1396 = vadd.f32 0.0, %v1395
      %v1397 = vpop.f32.mrb[0].mxu0
      %1398 = vmatprep.mubr.bf16.mxu0 0
      %1399 = vmatmul.mubr.bf16.gmra.mrb[0].mxu0 %v1338
      %v1400 = vpop.f32.mrb[0].mxu0
      %v1401 = vadd.f32 0.0, %v1400
      %v1402 = vpop.f32.mrb[0].mxu0
      %v1403 = vpop.f32.mrb[0].mxu0
      %v1404 = vadd.f32 0.0, %v1403
      %v1405 = vpop.f32.mrb[0].mxu0
      %1406 = vmatprep.mubr.bf16.mxu0 0
      %1407 = vmatmul.mubr.bf16.gmra.mrb[0].mxu0 %v1341
      %v1408 = vpop.f32.mrb[0].mxu0
      %v1409 = vadd.f32 0.0, %v1408
      %v1410 = vpop.f32.mrb[0].mxu0
      %v1411 = vpop.f32.mrb[0].mxu0
      %v1412 = vadd.f32 0.0, %v1411
      %v1413 = vpop.f32.mrb[0].mxu0
      %1414 = vmatprep.mubr.bf16.mxu0 0
      %1415 = vmatmul.mubr.bf16.gmra.mrb[0].mxu0 %v1344
      %v1416 = vpop.f32.mrb[0].mxu0
      %v1417 = vadd.f32 0.0, %v1416
      %v1418 = vpop.f32.mrb[0].mxu0
      %v1419 = vpop.f32.mrb[0].mxu0
      %v1420 = vadd.f32 0.0, %v1419
      %v1421 = vpop.f32.mrb[0].mxu0
      %1422 = vdwg.mxu0
      %v1424 = vsel %vm1244, %v1204, 0
      %v1427 = vsel %vm1244, %v1205, 0
      %v1430 = vsel %vm1244, %v1206, 0
      %v1433 = vsel %vm1244, %v1207, 0
      %v1436 = vsel %vm1244, %v1220, 0
      %v1439 = vsel %vm1244, %v1221, 0
      %v1442 = vsel %vm1244, %v1222, 0
      %v1445 = vsel %vm1244, %v1223, 0
      %1447 = vmatprep.subr.bf16.mxu0 0
      %1448 = vmatpush1.bf16.xpose.msra.mxu0 %v1436
      %1449 = vmatprep.subr.bf16.mxu0 0
      %1450 = vmatpush1.bf16.xpose.msra.mxu0 %v1439
      %1451 = vmatprep.subr.bf16.mxu0 0
      %1452 = vmatpush1.bf16.xpose.msra.mxu0 %v1442
      %1453 = vmatprep.subr.bf16.mxu0 0
      %1454 = vmatpush1.bf16.xpose.msra.mxu0 %v1445
      %1455 = vmatprep.subr.bf16.mxu0 0
      %1456 = vmatpush1.bf16.xpose.msra.mxu0 0
      %1457 = vmatprep.subr.bf16.mxu0 0
      %1458 = vmatpush1.bf16.xpose.msra.mxu0 0
      %1459 = vmatprep.subr.bf16.mxu0 0
      %1460 = vmatpush1.bf16.xpose.msra.mxu0 0
      %1461 = vmatprep.subr.bf16.mxu0 0
      %1462 = vmatpush1.bf16.xpose.msra.mxu0 0
      %1463 = vmatprep.subr.bf16.mxu0 0
      %1464 = vmatpush1.bf16.xpose.msra.mxu0 0
      %1465 = vmatprep.subr.bf16.mxu0 0
      %1466 = vmatpush1.bf16.xpose.msra.mxu0 0
      %1467 = vmatprep.subr.bf16.mxu0 0
      %1468 = vmatpush1.bf16.xpose.msra.mxu0 0
      %1469 = vmatprep.subr.bf16.mxu0 0
      %1470 = vmatpush1.bf16.xpose.msra.mxu0 0
      %1471 = vmatprep.subr.bf16.mxu0 0
      %1472 = vmatpush1.bf16.xpose.msra.mxu0 0
      %1473 = vmatprep.subr.bf16.mxu0 0
      %1474 = vmatpush1.bf16.xpose.msra.mxu0 0
      %1475 = vmatprep.subr.bf16.mxu0 0
      %1476 = vmatpush1.bf16.xpose.msra.mxu0 0
      %1477 = vmatprep.subr.bf16.mxu0 0
      %1478 = vmatpush1.bf16.xpose.msra.mxu0 0
      %1479 = vmatprep.mubr.bf16.mxu0 0
      %1480 = vmatmul.mubr.bf16.gmra.mrb[0].mxu0 %v1424
      %v1481 = vpop.f32.mrb[0].mxu0
      %v1482 = vadd.f32 0.0, %v1481
      %v1483 = vpop.f32.mrb[0].mxu0
      %v1484 = vpop.f32.mrb[0].mxu0
      %v1485 = vadd.f32 0.0, %v1484
      %v1486 = vpop.f32.mrb[0].mxu0
      %1487 = vmatprep.mubr.bf16.mxu0 0
      %1488 = vmatmul.mubr.bf16.gmra.mrb[0].mxu0 %v1427
      %v1489 = vpop.f32.mrb[0].mxu0
      %v1490 = vadd.f32 0.0, %v1489
      %v1491 = vpop.f32.mrb[0].mxu0
      %v1492 = vpop.f32.mrb[0].mxu0
      %v1493 = vadd.f32 0.0, %v1492
      %v1494 = vpop.f32.mrb[0].mxu0
      %1495 = vmatprep.mubr.bf16.mxu0 0
      %1496 = vmatmul.mubr.bf16.gmra.mrb[0].mxu0 %v1430
      %v1497 = vpop.f32.mrb[0].mxu0
      %v1498 = vadd.f32 0.0, %v1497
      %v1499 = vpop.f32.mrb[0].mxu0
      %v1500 = vpop.f32.mrb[0].mxu0
      %v1501 = vadd.f32 0.0, %v1500
      %v1502 = vpop.f32.mrb[0].mxu0
      %1503 = vmatprep.mubr.bf16.mxu0 0
      %1504 = vmatmul.mubr.bf16.gmra.mrb[0].mxu0 %v1433
      %v1505 = vpop.f32.mrb[0].mxu0
      %v1506 = vadd.f32 0.0, %v1505
      %v1507 = vpop.f32.mrb[0].mxu0
      %v1508 = vpop.f32.mrb[0].mxu0
      %v1509 = vadd.f32 0.0, %v1508
      %v1510 = vpop.f32.mrb[0].mxu0
      %1511 = vdwg.mxu0
      %v1513 = vsel %vm1244, %v1208, 0
      %v1516 = vsel %vm1244, %v1209, 0
      %v1519 = vsel %vm1244, %v1210, 0
      %v1522 = vsel %vm1244, %v1211, 0
      %v1525 = vsel %vm1244, %v1224, 0
      %v1528 = vsel %vm1244, %v1225, 0
      %v1531 = vsel %vm1244, %v1226, 0
      %v1534 = vsel %vm1244, %v1227, 0
      %1536 = vmatprep.subr.bf16.mxu0 0
      %1537 = vmatpush1.bf16.xpose.msra.mxu0 %v1525
      %1538 = vmatprep.subr.bf16.mxu0 0
      %1539 = vmatpush1.bf16.xpose.msra.mxu0 %v1528
      %1540 = vmatprep.subr.bf16.mxu0 0
      %1541 = vmatpush1.bf16.xpose.msra.mxu0 %v1531
      %1542 = vmatprep.subr.bf16.mxu0 0
      %1543 = vmatpush1.bf16.xpose.msra.mxu0 %v1534
      %1544 = vmatprep.subr.bf16.mxu0 0
      %1545 = vmatpush1.bf16.xpose.msra.mxu0 0
      %1546 = vmatprep.subr.bf16.mxu0 0
      %1547 = vmatpush1.bf16.xpose.msra.mxu0 0
      %1548 = vmatprep.subr.bf16.mxu0 0
      %1549 = vmatpush1.bf16.xpose.msra.mxu0 0
      %1550 = vmatprep.subr.bf16.mxu0 0
      %1551 = vmatpush1.bf16.xpose.msra.mxu0 0
      %1552 = vmatprep.subr.bf16.mxu0 0
      %1553 = vmatpush1.bf16.xpose.msra.mxu0 0
      %1554 = vmatprep.subr.bf16.mxu0 0
      %1555 = vmatpush1.bf16.xpose.msra.mxu0 0
      %1556 = vmatprep.subr.bf16.mxu0 0
      %1557 = vmatpush1.bf16.xpose.msra.mxu0 0
      %1558 = vmatprep.subr.bf16.mxu0 0
      %1559 = vmatpush1.bf16.xpose.msra.mxu0 0
      %1560 = vmatprep.subr.bf16.mxu0 0
      %1561 = vmatpush1.bf16.xpose.msra.mxu0 0
      %1562 = vmatprep.subr.bf16.mxu0 0
      %1563 = vmatpush1.bf16.xpose.msra.mxu0 0
      %1564 = vmatprep.subr.bf16.mxu0 0
      %1565 = vmatpush1.bf16.xpose.msra.mxu0 0
      %1566 = vmatprep.subr.bf16.mxu0 0
      %1567 = vmatpush1.bf16.xpose.msra.mxu0 0
      %1568 = vmatprep.mubr.bf16.mxu0 0
      %1569 = vmatmul.mubr.bf16.gmra.mrb[0].mxu0 %v1513
      %v1570 = vpop.f32.mrb[0].mxu0
      %v1571 = vadd.f32 0.0, %v1570
      %v1572 = vpop.f32.mrb[0].mxu0
      %v1573 = vpop.f32.mrb[0].mxu0
      %v1574 = vadd.f32 0.0, %v1573
      %v1575 = vpop.f32.mrb[0].mxu0
      %1576 = vmatprep.mubr.bf16.mxu0 0
      %1577 = vmatmul.mubr.bf16.gmra.mrb[0].mxu0 %v1516
      %v1578 = vpop.f32.mrb[0].mxu0
      %v1579 = vadd.f32 0.0, %v1578
      %v1580 = vpop.f32.mrb[0].mxu0
      %v1581 = vpop.f32.mrb[0].mxu0
      %v1582 = vadd.f32 0.0, %v1581
      %v1583 = vpop.f32.mrb[0].mxu0
      %1584 = vmatprep.mubr.bf16.mxu0 0
      %1585 = vmatmul.mubr.bf16.gmra.mrb[0].mxu0 %v1519
      %v1586 = vpop.f32.mrb[0].mxu0
      %v1587 = vadd.f32 0.0, %v1586
      %v1588 = vpop.f32.mrb[0].mxu0
      %v1589 = vpop.f32.mrb[0].mxu0
      %v1590 = vadd.f32 0.0, %v1589
      %v1591 = vpop.f32.mrb[0].mxu0
      %1592 = vmatprep.mubr.bf16.mxu0 0
      %1593 = vmatmul.mubr.bf16.gmra.mrb[0].mxu0 %v1522
      %v1594 = vpop.f32.mrb[0].mxu0
      %v1595 = vadd.f32 0.0, %v1594
      %v1596 = vpop.f32.mrb[0].mxu0
      %v1597 = vpop.f32.mrb[0].mxu0
      %v1598 = vadd.f32 0.0, %v1597
      %v1599 = vpop.f32.mrb[0].mxu0
      %1600 = vdwg.mxu0
      %vm1601 = vcmask 523264
      %v1602 = vsel %vm1601, %v1304, -inf
      %1603 = vmax.xlane.f32.xlu0 %v1602
      %v1604 = vpop.xlane.xlu0 %1603
      %v1605 = vsel %vm1601, %v1307, -inf
      %1606 = vmax.xlane.f32.xlu0 %v1605
      %v1607 = vpop.xlane.xlu0 %1606
      %v1608 = vsel %vm1601, %v1312, -inf
      %1609 = vmax.xlane.f32.xlu0 %v1608
      %v1610 = vpop.xlane.xlu0 %1609
      %v1611 = vsel %vm1601, %v1315, -inf
      %1612 = vmax.xlane.f32.xlu0 %v1611
      %v1613 = vpop.xlane.xlu0 %1612
      %v1614 = vsel %vm1601, %v1320, -inf
      %1615 = vmax.xlane.f32.xlu0 %v1614
      %v1616 = vpop.xlane.xlu0 %1615
      %v1617 = vsel %vm1601, %v1323, -inf
      %1618 = vmax.xlane.f32.xlu0 %v1617
      %v1619 = vpop.xlane.xlu0 %1618
      %v1620 = vsel %vm1601, %v1328, -inf
      %1621 = vmax.xlane.f32.xlu0 %v1620
      %v1622 = vpop.xlane.xlu0 %1621
      %v1623 = vsel %vm1601, %v1331, -inf
      %1624 = vmax.xlane.f32.xlu0 %v1623
      %v1625 = vpop.xlane.xlu0 %1624
      %v1626 = vsel %vm1601, %v1393, -inf
      %1627 = vmax.xlane.f32.xlu0 %v1626
      %v1628 = vpop.xlane.xlu0 %1627
      %v1629 = vsel %vm1601, %v1396, -inf
      %1630 = vmax.xlane.f32.xlu0 %v1629
      %v1631 = vpop.xlane.xlu0 %1630
      %v1632 = vsel %vm1601, %v1401, -inf
      %1633 = vmax.xlane.f32.xlu0 %v1632
      %v1634 = vpop.xlane.xlu0 %1633
      %v1635 = vsel %vm1601, %v1404, -inf
      %1636 = vmax.xlane.f32.xlu0 %v1635
      %v1637 = vpop.xlane.xlu0 %1636
      %v1638 = vsel %vm1601, %v1409, -inf
      %1639 = vmax.xlane.f32.xlu0 %v1638
      %v1640 = vpop.xlane.xlu0 %1639
      %v1641 = vsel %vm1601, %v1412, -inf
      %1642 = vmax.xlane.f32.xlu0 %v1641
      %v1643 = vpop.xlane.xlu0 %1642
      %v1644 = vsel %vm1601, %v1417, -inf
      %1645 = vmax.xlane.f32.xlu0 %v1644
      %v1646 = vpop.xlane.xlu0 %1645
      %v1647 = vsel %vm1601, %v1420, -inf
      %1648 = vmax.xlane.f32.xlu0 %v1647
      %v1649 = vpop.xlane.xlu0 %1648
      %v1650 = vsel %vm1601, %v1482, -inf
      %1651 = vmax.xlane.f32.xlu0 %v1650
      %v1652 = vpop.xlane.xlu0 %1651
      %v1653 = vsel %vm1601, %v1485, -inf
      %1654 = vmax.xlane.f32.xlu0 %v1653
      %v1655 = vpop.xlane.xlu0 %1654
      %v1656 = vsel %vm1601, %v1490, -inf
      %1657 = vmax.xlane.f32.xlu0 %v1656
      %v1658 = vpop.xlane.xlu0 %1657
      %v1659 = vsel %vm1601, %v1493, -inf
      %1660 = vmax.xlane.f32.xlu0 %v1659
      %v1661 = vpop.xlane.xlu0 %1660
      %v1662 = vsel %vm1601, %v1498, -inf
      %1663 = vmax.xlane.f32.xlu0 %v1662
      %v1664 = vpop.xlane.xlu0 %1663
      %v1665 = vsel %vm1601, %v1501, -inf
      %1666 = vmax.xlane.f32.xlu0 %v1665
      %v1667 = vpop.xlane.xlu0 %1666
      %v1668 = vsel %vm1601, %v1506, -inf
      %1669 = vmax.xlane.f32.xlu0 %v1668
      %v1670 = vpop.xlane.xlu0 %1669
      %v1671 = vsel %vm1601, %v1509, -inf
      %1672 = vmax.xlane.f32.xlu0 %v1671
      %v1673 = vpop.xlane.xlu0 %1672
      %v1674 = vsel %vm1601, %v1571, -inf
      %1675 = vmax.xlane.f32.xlu0 %v1674
      %v1676 = vpop.xlane.xlu0 %1675
      %v1677 = vsel %vm1601, %v1574, -inf
      %1678 = vmax.xlane.f32.xlu0 %v1677
      %v1679 = vpop.xlane.xlu0 %1678
      %v1680 = vsel %vm1601, %v1579, -inf
      %1681 = vmax.xlane.f32.xlu0 %v1680
      %v1682 = vpop.xlane.xlu0 %1681
      %v1683 = vsel %vm1601, %v1582, -inf
      %1684 = vmax.xlane.f32.xlu0 %v1683
      %v1685 = vpop.xlane.xlu0 %1684
      %v1686 = vsel %vm1601, %v1587, -inf
      %1687 = vmax.xlane.f32.xlu0 %v1686
      %v1688 = vpop.xlane.xlu0 %1687
      %v1689 = vsel %vm1601, %v1590, -inf
      %1690 = vmax.xlane.f32.xlu0 %v1689
      %v1691 = vpop.xlane.xlu0 %1690
      %v1692 = vsel %vm1601, %v1595, -inf
      %1693 = vmax.xlane.f32.xlu0 %v1692
      %v1694 = vpop.xlane.xlu0 %1693
      %v1695 = vsel %vm1601, %v1598, -inf
      %1696 = vmax.xlane.f32.xlu0 %v1695
      %v1697 = vpop.xlane.xlu0 %1696
      %v1698 = vsub.f32 %v1304, %v1604
      %v1699 = vsub.f32 %v1307, %v1607
      %v1700 = vsub.f32 %v1312, %v1610
      %v1701 = vsub.f32 %v1315, %v1613
      %v1702 = vsub.f32 %v1320, %v1616
      %v1703 = vsub.f32 %v1323, %v1619
      %v1704 = vsub.f32 %v1328, %v1622
      %v1705 = vsub.f32 %v1331, %v1625
      %v1706 = vsub.f32 %v1393, %v1628
      %v1707 = vsub.f32 %v1396, %v1631
      %v1708 = vsub.f32 %v1401, %v1634
      %v1709 = vsub.f32 %v1404, %v1637
      %v1710 = vsub.f32 %v1409, %v1640
      %v1711 = vsub.f32 %v1412, %v1643
      %v1712 = vsub.f32 %v1417, %v1646
      %v1713 = vsub.f32 %v1420, %v1649
      %v1714 = vsub.f32 %v1482, %v1652
      %v1715 = vsub.f32 %v1485, %v1655
      %v1716 = vsub.f32 %v1490, %v1658
      %v1717 = vsub.f32 %v1493, %v1661
      %v1718 = vsub.f32 %v1498, %v1664
      %v1719 = vsub.f32 %v1501, %v1667
      %v1720 = vsub.f32 %v1506, %v1670
      %v1721 = vsub.f32 %v1509, %v1673
      %v1722 = vsub.f32 %v1571, %v1676
      %v1723 = vsub.f32 %v1574, %v1679
      %v1724 = vsub.f32 %v1579, %v1682
      %v1725 = vsub.f32 %v1582, %v1685
      %v1726 = vsub.f32 %v1587, %v1688
      %v1727 = vsub.f32 %v1590, %v1691
      %v1728 = vsub.f32 %v1595, %v1694
      %v1729 = vsub.f32 %v1598, %v1697
      %v1730 = vmul.f32 %v1698, 1.442695
      %v1731 = vpow.pop %v1730
      %v1732 = vmul.f32 %v1699, 1.442695
      %v1733 = vpow.pop %v1732
      %v1734 = vmul.f32 %v1700, 1.442695
      %v1735 = vpow.pop %v1734
      %v1736 = vmul.f32 %v1701, 1.442695
      %v1737 = vpow.pop %v1736
      %v1738 = vmul.f32 %v1702, 1.442695
      %v1739 = vpow.pop %v1738
      %v1740 = vmul.f32 %v1703, 1.442695
      %v1741 = vpow.pop %v1740
      %v1742 = vmul.f32 %v1704, 1.442695
      %v1743 = vpow.pop %v1742
      %v1744 = vmul.f32 %v1705, 1.442695
      %v1745 = vpow.pop %v1744
      %v1746 = vmul.f32 %v1706, 1.442695
      %v1747 = vpow.pop %v1746
      %v1748 = vmul.f32 %v1707, 1.442695
      %v1749 = vpow.pop %v1748
      %v1750 = vmul.f32 %v1708, 1.442695
      %v1751 = vpow.pop %v1750
      %v1752 = vmul.f32 %v1709, 1.442695
      %v1753 = vpow.pop %v1752
      %v1754 = vmul.f32 %v1710, 1.442695
      %v1755 = vpow.pop %v1754
      %v1756 = vmul.f32 %v1711, 1.442695
      %v1757 = vpow.pop %v1756
      %v1758 = vmul.f32 %v1712, 1.442695
      %v1759 = vpow.pop %v1758
      %v1760 = vmul.f32 %v1713, 1.442695
      %v1761 = vpow.pop %v1760
      %v1762 = vmul.f32 %v1714, 1.442695
      %v1763 = vpow.pop %v1762
      %v1764 = vmul.f32 %v1715, 1.442695
      %v1765 = vpow.pop %v1764
      %v1766 = vmul.f32 %v1716, 1.442695
      %v1767 = vpow.pop %v1766
      %v1768 = vmul.f32 %v1717, 1.442695
      %v1769 = vpow.pop %v1768
      %v1770 = vmul.f32 %v1718, 1.442695
      %v1771 = vpow.pop %v1770
      %v1772 = vmul.f32 %v1719, 1.442695
      %v1773 = vpow.pop %v1772
      %v1774 = vmul.f32 %v1720, 1.442695
      %v1775 = vpow.pop %v1774
      %v1776 = vmul.f32 %v1721, 1.442695
      %v1777 = vpow.pop %v1776
      %v1778 = vmul.f32 %v1722, 1.442695
      %v1779 = vpow.pop %v1778
      %v1780 = vmul.f32 %v1723, 1.442695
      %v1781 = vpow.pop %v1780
      %v1782 = vmul.f32 %v1724, 1.442695
      %v1783 = vpow.pop %v1782
      %v1784 = vmul.f32 %v1725, 1.442695
      %v1785 = vpow.pop %v1784
      %v1786 = vmul.f32 %v1726, 1.442695
      %v1787 = vpow.pop %v1786
      %v1788 = vmul.f32 %v1727, 1.442695
      %v1789 = vpow.pop %v1788
      %v1790 = vmul.f32 %v1728, 1.442695
      %v1791 = vpow.pop %v1790
      %v1792 = vmul.f32 %v1729, 1.442695
      %v1793 = vpow.pop %v1792
      %v1794 = vsel %vm1601, %v1731, 0.0
      %1795 = vadd.xlane.f32.xlu0 %v1794
      %v1796 = vpop.xlane.xlu0 %1795
      %v1797 = vsel %vm1601, %v1733, 0.0
      %1798 = vadd.xlane.f32.xlu0 %v1797
      %v1799 = vpop.xlane.xlu0 %1798
      %v1800 = vsel %vm1601, %v1735, 0.0
      %1801 = vadd.xlane.f32.xlu0 %v1800
      %v1802 = vpop.xlane.xlu0 %1801
      %v1803 = vsel %vm1601, %v1737, 0.0
      %1804 = vadd.xlane.f32.xlu0 %v1803
      %v1805 = vpop.xlane.xlu0 %1804
      %v1806 = vsel %vm1601, %v1739, 0.0
      %1807 = vadd.xlane.f32.xlu0 %v1806
      %v1808 = vpop.xlane.xlu0 %1807
      %v1809 = vsel %vm1601, %v1741, 0.0
      %1810 = vadd.xlane.f32.xlu0 %v1809
      %v1811 = vpop.xlane.xlu0 %1810
      %v1812 = vsel %vm1601, %v1743, 0.0
      %1813 = vadd.xlane.f32.xlu0 %v1812
      %v1814 = vpop.xlane.xlu0 %1813
      %v1815 = vsel %vm1601, %v1745, 0.0
      %1816 = vadd.xlane.f32.xlu0 %v1815
      %v1817 = vpop.xlane.xlu0 %1816
      %v1818 = vsel %vm1601, %v1747, 0.0
      %1819 = vadd.xlane.f32.xlu0 %v1818
      %v1820 = vpop.xlane.xlu0 %1819
      %v1821 = vsel %vm1601, %v1749, 0.0
      %1822 = vadd.xlane.f32.xlu0 %v1821
      %v1823 = vpop.xlane.xlu0 %1822
      %v1824 = vsel %vm1601, %v1751, 0.0
      %1825 = vadd.xlane.f32.xlu0 %v1824
      %v1826 = vpop.xlane.xlu0 %1825
      %v1827 = vsel %vm1601, %v1753, 0.0
      %1828 = vadd.xlane.f32.xlu0 %v1827
      %v1829 = vpop.xlane.xlu0 %1828
      %v1830 = vsel %vm1601, %v1755, 0.0
      %1831 = vadd.xlane.f32.xlu0 %v1830
      %v1832 = vpop.xlane.xlu0 %1831
      %v1833 = vsel %vm1601, %v1757, 0.0
      %1834 = vadd.xlane.f32.xlu0 %v1833
      %v1835 = vpop.xlane.xlu0 %1834
      %v1836 = vsel %vm1601, %v1759, 0.0
      %1837 = vadd.xlane.f32.xlu0 %v1836
      %v1838 = vpop.xlane.xlu0 %1837
      %v1839 = vsel %vm1601, %v1761, 0.0
      %1840 = vadd.xlane.f32.xlu0 %v1839
      %v1841 = vpop.xlane.xlu0 %1840
      %v1842 = vsel %vm1601, %v1763, 0.0
      %1843 = vadd.xlane.f32.xlu0 %v1842
      %v1844 = vpop.xlane.xlu0 %1843
      %v1845 = vsel %vm1601, %v1765, 0.0
      %1846 = vadd.xlane.f32.xlu0 %v1845
      %v1847 = vpop.xlane.xlu0 %1846
      %v1848 = vsel %vm1601, %v1767, 0.0
      %1849 = vadd.xlane.f32.xlu0 %v1848
      %v1850 = vpop.xlane.xlu0 %1849
      %v1851 = vsel %vm1601, %v1769, 0.0
      %1852 = vadd.xlane.f32.xlu0 %v1851
      %v1853 = vpop.xlane.xlu0 %1852
      %v1854 = vsel %vm1601, %v1771, 0.0
      %1855 = vadd.xlane.f32.xlu0 %v1854
      %v1856 = vpop.xlane.xlu0 %1855
      %v1857 = vsel %vm1601, %v1773, 0.0
      %1858 = vadd.xlane.f32.xlu0 %v1857
      %v1859 = vpop.xlane.xlu0 %1858
      %v1860 = vsel %vm1601, %v1775, 0.0
      %1861 = vadd.xlane.f32.xlu0 %v1860
      %v1862 = vpop.xlane.xlu0 %1861
      %v1863 = vsel %vm1601, %v1777, 0.0
      %1864 = vadd.xlane.f32.xlu0 %v1863
      %v1865 = vpop.xlane.xlu0 %1864
      %v1866 = vsel %vm1601, %v1779, 0.0
      %1867 = vadd.xlane.f32.xlu0 %v1866
      %v1868 = vpop.xlane.xlu0 %1867
      %v1869 = vsel %vm1601, %v1781, 0.0
      %1870 = vadd.xlane.f32.xlu0 %v1869
      %v1871 = vpop.xlane.xlu0 %1870
      %v1872 = vsel %vm1601, %v1783, 0.0
      %1873 = vadd.xlane.f32.xlu0 %v1872
      %v1874 = vpop.xlane.xlu0 %1873
      %v1875 = vsel %vm1601, %v1785, 0.0
      %1876 = vadd.xlane.f32.xlu0 %v1875
      %v1877 = vpop.xlane.xlu0 %1876
      %v1878 = vsel %vm1601, %v1787, 0.0
      %1879 = vadd.xlane.f32.xlu0 %v1878
      %v1880 = vpop.xlane.xlu0 %1879
      %v1881 = vsel %vm1601, %v1789, 0.0
      %1882 = vadd.xlane.f32.xlu0 %v1881
      %v1883 = vpop.xlane.xlu0 %1882
      %v1884 = vsel %vm1601, %v1791, 0.0
      %1885 = vadd.xlane.f32.xlu0 %v1884
      %v1886 = vpop.xlane.xlu0 %1885
      %v1887 = vsel %vm1601, %v1793, 0.0
      %1888 = vadd.xlane.f32.xlu0 %v1887
      %v1889 = vpop.xlane.xlu0 %1888
      %v1890 = vpack.c.bf16 %v1733, %v1731
      %v1891 = vpack.c.bf16 %v1737, %v1735
      %v1892 = vpack.c.bf16 %v1741, %v1739
      %v1893 = vpack.c.bf16 %v1745, %v1743
      %v1894 = vpack.c.bf16 %v1749, %v1747
      %v1895 = vpack.c.bf16 %v1753, %v1751
      %v1896 = vpack.c.bf16 %v1757, %v1755
      %v1897 = vpack.c.bf16 %v1761, %v1759
      %v1898 = vpack.c.bf16 %v1765, %v1763
      %v1899 = vpack.c.bf16 %v1769, %v1767
      %v1900 = vpack.c.bf16 %v1773, %v1771
      %v1901 = vpack.c.bf16 %v1777, %v1775
      %v1902 = vpack.c.bf16 %v1781, %v1779
      %v1903 = vpack.c.bf16 %v1785, %v1783
      %v1904 = vpack.c.bf16 %v1789, %v1787
      %v1905 = vpack.c.bf16 %v1793, %v1791
      %v1907 = vsel %vm1601, %v1890, 0
      %v1910 = vsel %vm1601, %v1891, 0
      %v1913 = vsel %vm1601, %v1892, 0
      %v1916 = vsel %vm1601, %v1893, 0
      %1918 = vmatprep.subr.bf16.mxu0 0
      %1919 = vmatpush1.bf16.msra.mxu0 %v1228
      %1920 = vmatprep.subr.bf16.mxu0 0
      %1921 = vmatpush1.bf16.msra.mxu0 %v1229
      %1922 = vmatprep.subr.bf16.mxu0 0
      %1923 = vmatpush1.bf16.msra.mxu0 %v1230
      %1924 = vmatprep.subr.bf16.mxu0 0
      %1925 = vmatpush1.bf16.msra.mxu0 %v1231
      %1926 = vmatprep.subr.bf16.mxu0 0
      %1927 = vmatpush1.bf16.msra.mxu0 0
      %1928 = vmatprep.subr.bf16.mxu0 0
      %1929 = vmatpush1.bf16.msra.mxu0 0
      %1930 = vmatprep.subr.bf16.mxu0 0
      %1931 = vmatpush1.bf16.msra.mxu0 0
      %1932 = vmatprep.subr.bf16.mxu0 0
      %1933 = vmatpush1.bf16.msra.mxu0 0
      %1934 = vmatprep.subr.bf16.mxu0 0
      %1935 = vmatpush1.bf16.msra.mxu0 0
      %1936 = vmatprep.subr.bf16.mxu0 0
      %1937 = vmatpush1.bf16.msra.mxu0 0
      %1938 = vmatprep.subr.bf16.mxu0 0
      %1939 = vmatpush1.bf16.msra.mxu0 0
      %1940 = vmatprep.subr.bf16.mxu0 0
      %1941 = vmatpush1.bf16.msra.mxu0 0
      %1942 = vmatprep.subr.bf16.mxu0 0
      %1943 = vmatpush1.bf16.msra.mxu0 0
      %1944 = vmatprep.subr.bf16.mxu0 0
      %1945 = vmatpush1.bf16.msra.mxu0 0
      %1946 = vmatprep.subr.bf16.mxu0 0
      %1947 = vmatpush1.bf16.msra.mxu0 0
      %1948 = vmatprep.subr.bf16.mxu0 0
      %1949 = vmatpush1.bf16.msra.mxu0 0
      %1950 = vmatprep.mubr.bf16.mxu0 0
      %1951 = vmatmul.mubr.bf16.gmra.mrb[0].mxu0 %v1907
      %v1952 = vpop.f32.mrb[0].mxu0
      %v1953 = vadd.f32 0.0, %v1952
      %v1954 = vpop.f32.mrb[0].mxu0
      %v1955 = vpop.f32.mrb[0].mxu0
      %v1956 = vadd.f32 0.0, %v1955
      %v1957 = vpop.f32.mrb[0].mxu0
      %1958 = vmatprep.mubr.bf16.mxu0 0
      %1959 = vmatmul.mubr.bf16.gmra.mrb[0].mxu0 %v1910
      %v1960 = vpop.f32.mrb[0].mxu0
      %v1961 = vadd.f32 0.0, %v1960
      %v1962 = vpop.f32.mrb[0].mxu0
      %v1963 = vpop.f32.mrb[0].mxu0
      %v1964 = vadd.f32 0.0, %v1963
      %v1965 = vpop.f32.mrb[0].mxu0
      %1966 = vmatprep.mubr.bf16.mxu0 0
      %1967 = vmatmul.mubr.bf16.gmra.mrb[0].mxu0 %v1913
      %v1968 = vpop.f32.mrb[0].mxu0
      %v1969 = vadd.f32 0.0, %v1968
      %v1970 = vpop.f32.mrb[0].mxu0
      %v1971 = vpop.f32.mrb[0].mxu0
      %v1972 = vadd.f32 0.0, %v1971
      %v1973 = vpop.f32.mrb[0].mxu0
      %1974 = vmatprep.mubr.bf16.mxu0 0
      %1975 = vmatmul.mubr.bf16.gmra.mrb[0].mxu0 %v1916
      %v1976 = vpop.f32.mrb[0].mxu0
      %v1977 = vadd.f32 0.0, %v1976
      %v1978 = vpop.f32.mrb[0].mxu0
      %v1979 = vpop.f32.mrb[0].mxu0
      %v1980 = vadd.f32 0.0, %v1979
      %v1981 = vpop.f32.mrb[0].mxu0
      %1982 = vdwg.mxu0
      %v1984 = vsel %vm1601, %v1894, 0
      %v1987 = vsel %vm1601, %v1895, 0
      %v1990 = vsel %vm1601, %v1896, 0
      %v1993 = vsel %vm1601, %v1897, 0
      %1995 = vmatprep.subr.bf16.mxu0 0
      %1996 = vmatpush1.bf16.msra.mxu0 %v1232
      %1997 = vmatprep.subr.bf16.mxu0 0
      %1998 = vmatpush1.bf16.msra.mxu0 %v1233
      %1999 = vmatprep.subr.bf16.mxu0 0
      %2000 = vmatpush1.bf16.msra.mxu0 %v1234
      %2001 = vmatprep.subr.bf16.mxu0 0
      %2002 = vmatpush1.bf16.msra.mxu0 %v1235
      %2003 = vmatprep.subr.bf16.mxu0 0
      %2004 = vmatpush1.bf16.msra.mxu0 0
      %2005 = vmatprep.subr.bf16.mxu0 0
      %2006 = vmatpush1.bf16.msra.mxu0 0
      %2007 = vmatprep.subr.bf16.mxu0 0
      %2008 = vmatpush1.bf16.msra.mxu0 0
      %2009 = vmatprep.subr.bf16.mxu0 0
      %2010 = vmatpush1.bf16.msra.mxu0 0
      %2011 = vmatprep.subr.bf16.mxu0 0
      %2012 = vmatpush1.bf16.msra.mxu0 0
      %2013 = vmatprep.subr.bf16.mxu0 0
      %2014 = vmatpush1.bf16.msra.mxu0 0
      %2015 = vmatprep.subr.bf16.mxu0 0
      %2016 = vmatpush1.bf16.msra.mxu0 0
      %2017 = vmatprep.subr.bf16.mxu0 0
      %2018 = vmatpush1.bf16.msra.mxu0 0
      %2019 = vmatprep.subr.bf16.mxu0 0
      %2020 = vmatpush1.bf16.msra.mxu0 0
      %2021 = vmatprep.subr.bf16.mxu0 0
      %2022 = vmatpush1.bf16.msra.mxu0 0
      %2023 = vmatprep.subr.bf16.mxu0 0
      %2024 = vmatpush1.bf16.msra.mxu0 0
      %2025 = vmatprep.subr.bf16.mxu0 0
      %2026 = vmatpush1.bf16.msra.mxu0 0
      %2027 = vmatprep.mubr.bf16.mxu0 0
      %2028 = vmatmul.mubr.bf16.gmra.mrb[0].mxu0 %v1984
      %v2029 = vpop.f32.mrb[0].mxu0
      %v2030 = vadd.f32 0.0, %v2029
      %v2031 = vpop.f32.mrb[0].mxu0
      %v2032 = vpop.f32.mrb[0].mxu0
      %v2033 = vadd.f32 0.0, %v2032
      %v2034 = vpop.f32.mrb[0].mxu0
      %2035 = vmatprep.mubr.bf16.mxu0 0
      %2036 = vmatmul.mubr.bf16.gmra.mrb[0].mxu0 %v1987
      %v2037 = vpop.f32.mrb[0].mxu0
      %v2038 = vadd.f32 0.0, %v2037
      %v2039 = vpop.f32.mrb[0].mxu0
      %v2040 = vpop.f32.mrb[0].mxu0
      %v2041 = vadd.f32 0.0, %v2040
      %v2042 = vpop.f32.mrb[0].mxu0
      %2043 = vmatprep.mubr.bf16.mxu0 0
      %2044 = vmatmul.mubr.bf16.gmra.mrb[0].mxu0 %v1990
      %v2045 = vpop.f32.mrb[0].mxu0
      %v2046 = vadd.f32 0.0, %v2045
      %v2047 = vpop.f32.mrb[0].mxu0
      %v2048 = vpop.f32.mrb[0].mxu0
      %v2049 = vadd.f32 0.0, %v2048
      %v2050 = vpop.f32.mrb[0].mxu0
      %2051 = vmatprep.mubr.bf16.mxu0 0
      %2052 = vmatmul.mubr.bf16.gmra.mrb[0].mxu0 %v1993
      %v2053 = vpop.f32.mrb[0].mxu0
      %v2054 = vadd.f32 0.0, %v2053
      %v2055 = vpop.f32.mrb[0].mxu0
      %v2056 = vpop.f32.mrb[0].mxu0
      %v2057 = vadd.f32 0.0, %v2056
      %v2058 = vpop.f32.mrb[0].mxu0
      %2059 = vdwg.mxu0
      %v2061 = vsel %vm1601, %v1898, 0
      %v2064 = vsel %vm1601, %v1899, 0
      %v2067 = vsel %vm1601, %v1900, 0
      %v2070 = vsel %vm1601, %v1901, 0
      %2072 = vmatprep.subr.bf16.mxu0 0
      %2073 = vmatpush1.bf16.msra.mxu0 %v1236
      %2074 = vmatprep.subr.bf16.mxu0 0
      %2075 = vmatpush1.bf16.msra.mxu0 %v1237
      %2076 = vmatprep.subr.bf16.mxu0 0
      %2077 = vmatpush1.bf16.msra.mxu0 %v1238
      %2078 = vmatprep.subr.bf16.mxu0 0
      %2079 = vmatpush1.bf16.msra.mxu0 %v1239
      %2080 = vmatprep.subr.bf16.mxu0 0
      %2081 = vmatpush1.bf16.msra.mxu0 0
      %2082 = vmatprep.subr.bf16.mxu0 0
      %2083 = vmatpush1.bf16.msra.mxu0 0
      %2084 = vmatprep.subr.bf16.mxu0 0
      %2085 = vmatpush1.bf16.msra.mxu0 0
      %2086 = vmatprep.subr.bf16.mxu0 0
      %2087 = vmatpush1.bf16.msra.mxu0 0
      %2088 = vmatprep.subr.bf16.mxu0 0
      %2089 = vmatpush1.bf16.msra.mxu0 0
      %2090 = vmatprep.subr.bf16.mxu0 0
      %2091 = vmatpush1.bf16.msra.mxu0 0
      %2092 = vmatprep.subr.bf16.mxu0 0
      %2093 = vmatpush1.bf16.msra.mxu0 0
      %2094 = vmatprep.subr.bf16.mxu0 0
      %2095 = vmatpush1.bf16.msra.mxu0 0
      %2096 = vmatprep.subr.bf16.mxu0 0
      %2097 = vmatpush1.bf16.msra.mxu0 0
      %2098 = vmatprep.subr.bf16.mxu0 0
      %2099 = vmatpush1.bf16.msra.mxu0 0
      %2100 = vmatprep.subr.bf16.mxu0 0
      %2101 = vmatpush1.bf16.msra.mxu0 0
      %2102 = vmatprep.subr.bf16.mxu0 0
      %2103 = vmatpush1.bf16.msra.mxu0 0
      %2104 = vmatprep.mubr.bf16.mxu0 0
      %2105 = vmatmul.mubr.bf16.gmra.mrb[0].mxu0 %v2061
      %v2106 = vpop.f32.mrb[0].mxu0
      %v2107 = vadd.f32 0.0, %v2106
      %v2108 = vpop.f32.mrb[0].mxu0
      %v2109 = vpop.f32.mrb[0].mxu0
      %v2110 = vadd.f32 0.0, %v2109
      %v2111 = vpop.f32.mrb[0].mxu0
      %2112 = vmatprep.mubr.bf16.mxu0 0
      %2113 = vmatmul.mubr.bf16.gmra.mrb[0].mxu0 %v2064
      %v2114 = vpop.f32.mrb[0].mxu0
      %v2115 = vadd.f32 0.0, %v2114
      %v2116 = vpop.f32.mrb[0].mxu0
      %v2117 = vpop.f32.mrb[0].mxu0
      %v2118 = vadd.f32 0.0, %v2117
      %v2119 = vpop.f32.mrb[0].mxu0
      %2120 = vmatprep.mubr.bf16.mxu0 0
      %2121 = vmatmul.mubr.bf16.gmra.mrb[0].mxu0 %v2067
      %v2122 = vpop.f32.mrb[0].mxu0
      %v2123 = vadd.f32 0.0, %v2122
      %v2124 = vpop.f32.mrb[0].mxu0
      %v2125 = vpop.f32.mrb[0].mxu0
      %v2126 = vadd.f32 0.0, %v2125
      %v2127 = vpop.f32.mrb[0].mxu0
      %2128 = vmatprep.mubr.bf16.mxu0 0
      %2129 = vmatmul.mubr.bf16.gmra.mrb[0].mxu0 %v2070
      %v2130 = vpop.f32.mrb[0].mxu0
      %v2131 = vadd.f32 0.0, %v2130
      %v2132 = vpop.f32.mrb[0].mxu0
      %v2133 = vpop.f32.mrb[0].mxu0
      %v2134 = vadd.f32 0.0, %v2133
      %v2135 = vpop.f32.mrb[0].mxu0
      %2136 = vdwg.mxu0
      %v2138 = vsel %vm1601, %v1902, 0
      %v2141 = vsel %vm1601, %v1903, 0
      %v2144 = vsel %vm1601, %v1904, 0
      %v2147 = vsel %vm1601, %v1905, 0
      %2149 = vmatprep.subr.bf16.mxu0 0
      %2150 = vmatpush1.bf16.msra.mxu0 %v1240
      %2151 = vmatprep.subr.bf16.mxu0 0
      %2152 = vmatpush1.bf16.msra.mxu0 %v1241
      %2153 = vmatprep.subr.bf16.mxu0 0
      %2154 = vmatpush1.bf16.msra.mxu0 %v1242
      %2155 = vmatprep.subr.bf16.mxu0 0
      %2156 = vmatpush1.bf16.msra.mxu0 %v1243
      %2157 = vmatprep.subr.bf16.mxu0 0
      %2158 = vmatpush1.bf16.msra.mxu0 0
      %2159 = vmatprep.subr.bf16.mxu0 0
      %2160 = vmatpush1.bf16.msra.mxu0 0
      %2161 = vmatprep.subr.bf16.mxu0 0
      %2162 = vmatpush1.bf16.msra.mxu0 0
      %2163 = vmatprep.subr.bf16.mxu0 0
      %2164 = vmatpush1.bf16.msra.mxu0 0
      %2165 = vmatprep.subr.bf16.mxu0 0
      %2166 = vmatpush1.bf16.msra.mxu0 0
      %2167 = vmatprep.subr.bf16.mxu0 0
      %2168 = vmatpush1.bf16.msra.mxu0 0
      %2169 = vmatprep.subr.bf16.mxu0 0
      %2170 = vmatpush1.bf16.msra.mxu0 0
      %2171 = vmatprep.subr.bf16.mxu0 0
      %2172 = vmatpush1.bf16.msra.mxu0 0
      %2173 = vmatprep.subr.bf16.mxu0 0
      %2174 = vmatpush1.bf16.msra.mxu0 0
      %2175 = vmatprep.subr.bf16.mxu0 0
      %2176 = vmatpush1.bf16.msra.mxu0 0
      %2177 = vmatprep.subr.bf16.mxu0 0
      %2178 = vmatpush1.bf16.msra.mxu0 0
      %2179 = vmatprep.subr.bf16.mxu0 0
      %2180 = vmatpush1.bf16.msra.mxu0 0
      %2181 = vmatprep.mubr.bf16.mxu0 0
      %2182 = vmatmul.mubr.bf16.gmra.mrb[0].mxu0 %v2138
      %v2183 = vpop.f32.mrb[0].mxu0
      %v2184 = vadd.f32 0.0, %v2183
      %v2185 = vpop.f32.mrb[0].mxu0
      %v2186 = vpop.f32.mrb[0].mxu0
      %v2187 = vadd.f32 0.0, %v2186
      %v2188 = vpop.f32.mrb[0].mxu0
      %2189 = vmatprep.mubr.bf16.mxu0 0
      %2190 = vmatmul.mubr.bf16.gmra.mrb[0].mxu0 %v2141
      %v2191 = vpop.f32.mrb[0].mxu0
      %v2192 = vadd.f32 0.0, %v2191
      %v2193 = vpop.f32.mrb[0].mxu0
      %v2194 = vpop.f32.mrb[0].mxu0
      %v2195 = vadd.f32 0.0, %v2194
      %v2196 = vpop.f32.mrb[0].mxu0
      %2197 = vmatprep.mubr.bf16.mxu0 0
      %2198 = vmatmul.mubr.bf16.gmra.mrb[0].mxu0 %v2144
      %v2199 = vpop.f32.mrb[0].mxu0
      %v2200 = vadd.f32 0.0, %v2199
      %v2201 = vpop.f32.mrb[0].mxu0
      %v2202 = vpop.f32.mrb[0].mxu0
      %v2203 = vadd.f32 0.0, %v2202
      %v2204 = vpop.f32.mrb[0].mxu0
      %2205 = vmatprep.mubr.bf16.mxu0 0
      %2206 = vmatmul.mubr.bf16.gmra.mrb[0].mxu0 %v2147
      %v2207 = vpop.f32.mrb[0].mxu0
      %v2208 = vadd.f32 0.0, %v2207
      %v2209 = vpop.f32.mrb[0].mxu0
      %v2210 = vpop.f32.mrb[0].mxu0
      %v2211 = vadd.f32 0.0, %v2210
      %v2212 = vpop.f32.mrb[0].mxu0
      %2213 = vdwg.mxu0
      %v2214 = vrcp.pop %v1796
      %v2215 = vrcp.pop %v1799
      %v2216 = vrcp.pop %v1802
      %v2217 = vrcp.pop %v1805
      %v2218 = vrcp.pop %v1808
      %v2219 = vrcp.pop %v1811
      %v2220 = vrcp.pop %v1814
      %v2221 = vrcp.pop %v1817
      %v2222 = vrcp.pop %v1820
      %v2223 = vrcp.pop %v1823
      %v2224 = vrcp.pop %v1826
      %v2225 = vrcp.pop %v1829
      %v2226 = vrcp.pop %v1832
      %v2227 = vrcp.pop %v1835
      %v2228 = vrcp.pop %v1838
      %v2229 = vrcp.pop %v1841
      %v2230 = vrcp.pop %v1844
      %v2231 = vrcp.pop %v1847
      %v2232 = vrcp.pop %v1850
      %v2233 = vrcp.pop %v1853
      %v2234 = vrcp.pop %v1856
      %v2235 = vrcp.pop %v1859
      %v2236 = vrcp.pop %v1862
      %v2237 = vrcp.pop %v1865
      %v2238 = vrcp.pop %v1868
      %v2239 = vrcp.pop %v1871
      %v2240 = vrcp.pop %v1874
      %v2241 = vrcp.pop %v1877
      %v2242 = vrcp.pop %v1880
      %v2243 = vrcp.pop %v1883
      %v2244 = vrcp.pop %v1886
      %v2245 = vrcp.pop %v1889
      %v2246 = vmul.f32 %v1953, %v2214
      %v2247 = vmul.f32 %v1956, %v2215
      %v2248 = vmul.f32 %v1961, %v2216
      %v2249 = vmul.f32 %v1964, %v2217
      %v2250 = vmul.f32 %v1969, %v2218
      %v2251 = vmul.f32 %v1972, %v2219
      %v2252 = vmul.f32 %v1977, %v2220
      %v2253 = vmul.f32 %v1980, %v2221
      %v2254 = vmul.f32 %v2030, %v2222
      %v2255 = vmul.f32 %v2033, %v2223
      %v2256 = vmul.f32 %v2038, %v2224
      %v2257 = vmul.f32 %v2041, %v2225
      %v2258 = vmul.f32 %v2046, %v2226
      %v2259 = vmul.f32 %v2049, %v2227
      %v2260 = vmul.f32 %v2054, %v2228
      %v2261 = vmul.f32 %v2057, %v2229
      %v2262 = vmul.f32 %v2107, %v2230
      %v2263 = vmul.f32 %v2110, %v2231
      %v2264 = vmul.f32 %v2115, %v2232
      %v2265 = vmul.f32 %v2118, %v2233
      %v2266 = vmul.f32 %v2123, %v2234
      %v2267 = vmul.f32 %v2126, %v2235
      %v2268 = vmul.f32 %v2131, %v2236
      %v2269 = vmul.f32 %v2134, %v2237
      %v2270 = vmul.f32 %v2184, %v2238
      %v2271 = vmul.f32 %v2187, %v2239
      %v2272 = vmul.f32 %v2192, %v2240
      %v2273 = vmul.f32 %v2195, %v2241
      %v2274 = vmul.f32 %v2200, %v2242
      %v2275 = vmul.f32 %v2203, %v2243
      %v2276 = vmul.f32 %v2208, %v2244
      %v2277 = vmul.f32 %v2211, %v2245
      %v2278 = vpack.c.bf16 %v2247, %v2246
      %v2279 = vpack.c.bf16 %v2249, %v2248
      %v2280 = vpack.c.bf16 %v2251, %v2250
      %v2281 = vpack.c.bf16 %v2253, %v2252
      %v2282 = vpack.c.bf16 %v2255, %v2254
      %v2283 = vpack.c.bf16 %v2257, %v2256
      %v2284 = vpack.c.bf16 %v2259, %v2258
      %v2285 = vpack.c.bf16 %v2261, %v2260
      %v2286 = vpack.c.bf16 %v2263, %v2262
      %v2287 = vpack.c.bf16 %v2265, %v2264
      %v2288 = vpack.c.bf16 %v2267, %v2266
      %v2289 = vpack.c.bf16 %v2269, %v2268
      %v2290 = vpack.c.bf16 %v2271, %v2270
      %v2291 = vpack.c.bf16 %v2273, %v2272
      %v2292 = vpack.c.bf16 %v2275, %v2274
      %v2293 = vpack.c.bf16 %v2277, %v2276
      %v2294 = vld [vmem:[%s2] sm:$0xf]
      %v2295 = vld [vmem:[%s2 + $0x4] sm:$0xf]
      %v2296 = vld [vmem:[%s2 + $0x8] sm:$0xf]
      %v2297 = vld [vmem:[%s2 + $0xc] sm:$0xf]
      %v2298 = vld [vmem:[%s2 + $0x10] sm:$0xf]
      %v2299 = vld [vmem:[%s2 + $0x14] sm:$0xf]
      %v2300 = vld [vmem:[%s2 + $0x18] sm:$0xf]
      %v2301 = vld [vmem:[%s2 + $0x1c] sm:$0xf]
      %v2304 = vunpack.c.l.b16 %v2294
      %v2305 = vunpack.c.l.b16 %v2295
      %v2306 = vpack.c.b16 %v2305, %v2304
      %v2309 = vsel %vm1244, %v2278, 0
      %v2312 = vsel %vm1244, %v2279, 0
      %v2315 = vsel %vm1244, %v2280, 0
      %v2318 = vsel %vm1244, %v2281, 0
      %2320 = vmatprep.subr.bf16.mxu0 0
      %2321 = vmatpush1.bf16.msra.mxu0 %v2306
      %2322 = vmatprep.subr.bf16.mxu0 0
      %2323 = vmatpush1.bf16.msra.mxu0 0
      %2324 = vmatprep.subr.bf16.mxu0 0
      %2325 = vmatpush1.bf16.msra.mxu0 0
      %2326 = vmatprep.subr.bf16.mxu0 0
      %2327 = vmatpush1.bf16.msra.mxu0 0
      %2328 = vmatprep.subr.bf16.mxu0 0
      %2329 = vmatpush1.bf16.msra.mxu0 0
      %2330 = vmatprep.subr.bf16.mxu0 0
      %2331 = vmatpush1.bf16.msra.mxu0 0
      %2332 = vmatprep.subr.bf16.mxu0 0
      %2333 = vmatpush1.bf16.msra.mxu0 0
      %2334 = vmatprep.subr.bf16.mxu0 0
      %2335 = vmatpush1.bf16.msra.mxu0 0
      %2336 = vmatprep.subr.bf16.mxu0 0
      %2337 = vmatpush1.bf16.msra.mxu0 0
      %2338 = vmatprep.subr.bf16.mxu0 0
      %2339 = vmatpush1.bf16.msra.mxu0 0
      %2340 = vmatprep.subr.bf16.mxu0 0
      %2341 = vmatpush1.bf16.msra.mxu0 0
      %2342 = vmatprep.subr.bf16.mxu0 0
      %2343 = vmatpush1.bf16.msra.mxu0 0
      %2344 = vmatprep.subr.bf16.mxu0 0
      %2345 = vmatpush1.bf16.msra.mxu0 0
      %2346 = vmatprep.subr.bf16.mxu0 0
      %2347 = vmatpush1.bf16.msra.mxu0 0
      %2348 = vmatprep.subr.bf16.mxu0 0
      %2349 = vmatpush1.bf16.msra.mxu0 0
      %2350 = vmatprep.subr.bf16.mxu0 0
      %2351 = vmatpush1.bf16.msra.mxu0 0
      %2352 = vmatprep.mubr.bf16.mxu0 0
      %2353 = vmatmul.mubr.bf16.gmra.mrb[0].mxu0 %v2309
      %v2354 = vpop.f32.mrb[0].mxu0
      %v2355 = vadd.f32 0.0, %v2354
      %v2356 = vpop.f32.mrb[0].mxu0
      %v2357 = vpop.f32.mrb[0].mxu0
      %v2358 = vadd.f32 0.0, %v2357
      %v2359 = vpop.f32.mrb[0].mxu0
      %2360 = vmatprep.mubr.bf16.mxu0 0
      %2361 = vmatmul.mubr.bf16.gmra.mrb[0].mxu0 %v2312
      %v2362 = vpop.f32.mrb[0].mxu0
      %v2363 = vadd.f32 0.0, %v2362
      %v2364 = vpop.f32.mrb[0].mxu0
      %v2365 = vpop.f32.mrb[0].mxu0
      %v2366 = vadd.f32 0.0, %v2365
      %v2367 = vpop.f32.mrb[0].mxu0
      %2368 = vmatprep.mubr.bf16.mxu0 0
      %2369 = vmatmul.mubr.bf16.gmra.mrb[0].mxu0 %v2315
      %v2370 = vpop.f32.mrb[0].mxu0
      %v2371 = vadd.f32 0.0, %v2370
      %v2372 = vpop.f32.mrb[0].mxu0
      %v2373 = vpop.f32.mrb[0].mxu0
      %v2374 = vadd.f32 0.0, %v2373
      %v2375 = vpop.f32.mrb[0].mxu0
      %2376 = vmatprep.mubr.bf16.mxu0 0
      %2377 = vmatmul.mubr.bf16.gmra.mrb[0].mxu0 %v2318
      %v2378 = vpop.f32.mrb[0].mxu0
      %v2379 = vadd.f32 0.0, %v2378
      %v2380 = vpop.f32.mrb[0].mxu0
      %v2381 = vpop.f32.mrb[0].mxu0
      %v2382 = vadd.f32 0.0, %v2381
      %v2383 = vpop.f32.mrb[0].mxu0
      %2384 = vdwg.mxu0
      %v2387 = vunpack.c.l.b16 %v2296
      %v2388 = vunpack.c.l.b16 %v2297
      %v2389 = vpack.c.b16 %v2388, %v2387
      %v2392 = vsel %vm1244, %v2282, 0
      %v2395 = vsel %vm1244, %v2283, 0
      %v2398 = vsel %vm1244, %v2284, 0
      %v2401 = vsel %vm1244, %v2285, 0
      %2403 = vmatprep.subr.bf16.mxu0 0
      %2404 = vmatpush1.bf16.msra.mxu0 %v2389
      %2405 = vmatprep.subr.bf16.mxu0 0
      %2406 = vmatpush1.bf16.msra.mxu0 0
      %2407 = vmatprep.subr.bf16.mxu0 0
      %2408 = vmatpush1.bf16.msra.mxu0 0
      %2409 = vmatprep.subr.bf16.mxu0 0
      %2410 = vmatpush1.bf16.msra.mxu0 0
      %2411 = vmatprep.subr.bf16.mxu0 0
      %2412 = vmatpush1.bf16.msra.mxu0 0
      %2413 = vmatprep.subr.bf16.mxu0 0
      %2414 = vmatpush1.bf16.msra.mxu0 0
      %2415 = vmatprep.subr.bf16.mxu0 0
      %2416 = vmatpush1.bf16.msra.mxu0 0
      %2417 = vmatprep.subr.bf16.mxu0 0
      %2418 = vmatpush1.bf16.msra.mxu0 0
      %2419 = vmatprep.subr.bf16.mxu0 0
      %2420 = vmatpush1.bf16.msra.mxu0 0
      %2421 = vmatprep.subr.bf16.mxu0 0
      %2422 = vmatpush1.bf16.msra.mxu0 0
      %2423 = vmatprep.subr.bf16.mxu0 0
      %2424 = vmatpush1.bf16.msra.mxu0 0
      %2425 = vmatprep.subr.bf16.mxu0 0
      %2426 = vmatpush1.bf16.msra.mxu0 0
      %2427 = vmatprep.subr.bf16.mxu0 0
      %2428 = vmatpush1.bf16.msra.mxu0 0
      %2429 = vmatprep.subr.bf16.mxu0 0
      %2430 = vmatpush1.bf16.msra.mxu0 0
      %2431 = vmatprep.subr.bf16.mxu0 0
      %2432 = vmatpush1.bf16.msra.mxu0 0
      %2433 = vmatprep.subr.bf16.mxu0 0
      %2434 = vmatpush1.bf16.msra.mxu0 0
      %2435 = vmatprep.mubr.bf16.mxu0 0
      %2436 = vmatmul.mubr.bf16.gmra.mrb[0].mxu0 %v2392
      %v2437 = vpop.f32.mrb[0].mxu0
      %v2438 = vadd.f32 0.0, %v2437
      %v2439 = vpop.f32.mrb[0].mxu0
      %v2440 = vpop.f32.mrb[0].mxu0
      %v2441 = vadd.f32 0.0, %v2440
      %v2442 = vpop.f32.mrb[0].mxu0
      %2443 = vmatprep.mubr.bf16.mxu0 0
      %2444 = vmatmul.mubr.bf16.gmra.mrb[0].mxu0 %v2395
      %v2445 = vpop.f32.mrb[0].mxu0
      %v2446 = vadd.f32 0.0, %v2445
      %v2447 = vpop.f32.mrb[0].mxu0
      %v2448 = vpop.f32.mrb[0].mxu0
      %v2449 = vadd.f32 0.0, %v2448
      %v2450 = vpop.f32.mrb[0].mxu0
      %2451 = vmatprep.mubr.bf16.mxu0 0
      %2452 = vmatmul.mubr.bf16.gmra.mrb[0].mxu0 %v2398
      %v2453 = vpop.f32.mrb[0].mxu0
      %v2454 = vadd.f32 0.0, %v2453
      %v2455 = vpop.f32.mrb[0].mxu0
      %v2456 = vpop.f32.mrb[0].mxu0
      %v2457 = vadd.f32 0.0, %v2456
      %v2458 = vpop.f32.mrb[0].mxu0
      %2459 = vmatprep.mubr.bf16.mxu0 0
      %2460 = vmatmul.mubr.bf16.gmra.mrb[0].mxu0 %v2401
      %v2461 = vpop.f32.mrb[0].mxu0
      %v2462 = vadd.f32 0.0, %v2461
      %v2463 = vpop.f32.mrb[0].mxu0
      %v2464 = vpop.f32.mrb[0].mxu0
      %v2465 = vadd.f32 0.0, %v2464
      %v2466 = vpop.f32.mrb[0].mxu0
      %2467 = vdwg.mxu0
      %v2470 = vunpack.c.l.b16 %v2298
      %v2471 = vunpack.c.l.b16 %v2299
      %v2472 = vpack.c.b16 %v2471, %v2470
      %v2475 = vsel %vm1244, %v2286, 0
      %v2478 = vsel %vm1244, %v2287, 0
      %v2481 = vsel %vm1244, %v2288, 0
      %v2484 = vsel %vm1244, %v2289, 0
      %2486 = vmatprep.subr.bf16.mxu0 0
      %2487 = vmatpush1.bf16.msra.mxu0 %v2472
      %2488 = vmatprep.subr.bf16.mxu0 0
      %2489 = vmatpush1.bf16.msra.mxu0 0
      %2490 = vmatprep.subr.bf16.mxu0 0
      %2491 = vmatpush1.bf16.msra.mxu0 0
      %2492 = vmatprep.subr.bf16.mxu0 0
      %2493 = vmatpush1.bf16.msra.mxu0 0
      %2494 = vmatprep.subr.bf16.mxu0 0
      %2495 = vmatpush1.bf16.msra.mxu0 0
      %2496 = vmatprep.subr.bf16.mxu0 0
      %2497 = vmatpush1.bf16.msra.mxu0 0
      %2498 = vmatprep.subr.bf16.mxu0 0
      %2499 = vmatpush1.bf16.msra.mxu0 0
      %2500 = vmatprep.subr.bf16.mxu0 0
      %2501 = vmatpush1.bf16.msra.mxu0 0
      %2502 = vmatprep.subr.bf16.mxu0 0
      %2503 = vmatpush1.bf16.msra.mxu0 0
      %2504 = vmatprep.subr.bf16.mxu0 0
      %2505 = vmatpush1.bf16.msra.mxu0 0
      %2506 = vmatprep.subr.bf16.mxu0 0
      %2507 = vmatpush1.bf16.msra.mxu0 0
      %2508 = vmatprep.subr.bf16.mxu0 0
      %2509 = vmatpush1.bf16.msra.mxu0 0
      %2510 = vmatprep.subr.bf16.mxu0 0
      %2511 = vmatpush1.bf16.msra.mxu0 0
      %2512 = vmatprep.subr.bf16.mxu0 0
      %2513 = vmatpush1.bf16.msra.mxu0 0
      %2514 = vmatprep.subr.bf16.mxu0 0
      %2515 = vmatpush1.bf16.msra.mxu0 0
      %2516 = vmatprep.subr.bf16.mxu0 0
      %2517 = vmatpush1.bf16.msra.mxu0 0
      %2518 = vmatprep.mubr.bf16.mxu0 0
      %2519 = vmatmul.mubr.bf16.gmra.mrb[0].mxu0 %v2475
      %v2520 = vpop.f32.mrb[0].mxu0
      %v2521 = vadd.f32 0.0, %v2520
      %v2522 = vpop.f32.mrb[0].mxu0
      %v2523 = vpop.f32.mrb[0].mxu0
      %v2524 = vadd.f32 0.0, %v2523
      %v2525 = vpop.f32.mrb[0].mxu0
      %2526 = vmatprep.mubr.bf16.mxu0 0
      %2527 = vmatmul.mubr.bf16.gmra.mrb[0].mxu0 %v2478
      %v2528 = vpop.f32.mrb[0].mxu0
      %v2529 = vadd.f32 0.0, %v2528
      %v2530 = vpop.f32.mrb[0].mxu0
      %v2531 = vpop.f32.mrb[0].mxu0
      %v2532 = vadd.f32 0.0, %v2531
      %v2533 = vpop.f32.mrb[0].mxu0
      %2534 = vmatprep.mubr.bf16.mxu0 0
      %2535 = vmatmul.mubr.bf16.gmra.mrb[0].mxu0 %v2481
      %v2536 = vpop.f32.mrb[0].mxu0
      %v2537 = vadd.f32 0.0, %v2536
      %v2538 = vpop.f32.mrb[0].mxu0
      %v2539 = vpop.f32.mrb[0].mxu0
      %v2540 = vadd.f32 0.0, %v2539
      %v2541 = vpop.f32.mrb[0].mxu0
      %2542 = vmatprep.mubr.bf16.mxu0 0
      %2543 = vmatmul.mubr.bf16.gmra.mrb[0].mxu0 %v2484
      %v2544 = vpop.f32.mrb[0].mxu0
      %v2545 = vadd.f32 0.0, %v2544
      %v2546 = vpop.f32.mrb[0].mxu0
      %v2547 = vpop.f32.mrb[0].mxu0
      %v2548 = vadd.f32 0.0, %v2547
      %v2549 = vpop.f32.mrb[0].mxu0
      %2550 = vdwg.mxu0
      %v2553 = vunpack.c.l.b16 %v2300
      %v2554 = vunpack.c.l.b16 %v2301
      %v2555 = vpack.c.b16 %v2554, %v2553
      %v2558 = vsel %vm1244, %v2290, 0
      %v2561 = vsel %vm1244, %v2291, 0
      %v2564 = vsel %vm1244, %v2292, 0
      %v2567 = vsel %vm1244, %v2293, 0
      %2569 = vmatprep.subr.bf16.mxu0 0
      %2570 = vmatpush1.bf16.msra.mxu0 %v2555
      %2571 = vmatprep.subr.bf16.mxu0 0
      %2572 = vmatpush1.bf16.msra.mxu0 0
      %2573 = vmatprep.subr.bf16.mxu0 0
      %2574 = vmatpush1.bf16.msra.mxu0 0
      %2575 = vmatprep.subr.bf16.mxu0 0
      %2576 = vmatpush1.bf16.msra.mxu0 0
      %2577 = vmatprep.subr.bf16.mxu0 0
      %2578 = vmatpush1.bf16.msra.mxu0 0
      %2579 = vmatprep.subr.bf16.mxu0 0
      %2580 = vmatpush1.bf16.msra.mxu0 0
      %2581 = vmatprep.subr.bf16.mxu0 0
      %2582 = vmatpush1.bf16.msra.mxu0 0
      %2583 = vmatprep.subr.bf16.mxu0 0
      %2584 = vmatpush1.bf16.msra.mxu0 0
      %2585 = vmatprep.subr.bf16.mxu0 0
      %2586 = vmatpush1.bf16.msra.mxu0 0
      %2587 = vmatprep.subr.bf16.mxu0 0
      %2588 = vmatpush1.bf16.msra.mxu0 0
      %2589 = vmatprep.subr.bf16.mxu0 0
      %2590 = vmatpush1.bf16.msra.mxu0 0
      %2591 = vmatprep.subr.bf16.mxu0 0
      %2592 = vmatpush1.bf16.msra.mxu0 0
      %2593 = vmatprep.subr.bf16.mxu0 0
      %2594 = vmatpush1.bf16.msra.mxu0 0
      %2595 = vmatprep.subr.bf16.mxu0 0
      %2596 = vmatpush1.bf16.msra.mxu0 0
      %2597 = vmatprep.subr.bf16.mxu0 0
      %2598 = vmatpush1.bf16.msra.mxu0 0
      %2599 = vmatprep.subr.bf16.mxu0 0
      %2600 = vmatpush1.bf16.msra.mxu0 0
      %2601 = vmatprep.mubr.bf16.mxu0 0
      %2602 = vmatmul.mubr.bf16.gmra.mrb[0].mxu0 %v2558
      %v2603 = vpop.f32.mrb[0].mxu0
      %v2604 = vadd.f32 0.0, %v2603
      %v2605 = vpop.f32.mrb[0].mxu0
      %v2606 = vpop.f32.mrb[0].mxu0
      %v2607 = vadd.f32 0.0, %v2606
      %v2608 = vpop.f32.mrb[0].mxu0
      %2609 = vmatprep.mubr.bf16.mxu0 0
      %2610 = vmatmul.mubr.bf16.gmra.mrb[0].mxu0 %v2561
      %v2611 = vpop.f32.mrb[0].mxu0
      %v2612 = vadd.f32 0.0, %v2611
      %v2613 = vpop.f32.mrb[0].mxu0
      %v2614 = vpop.f32.mrb[0].mxu0
      %v2615 = vadd.f32 0.0, %v2614
      %v2616 = vpop.f32.mrb[0].mxu0
      %2617 = vmatprep.mubr.bf16.mxu0 0
      %2618 = vmatmul.mubr.bf16.gmra.mrb[0].mxu0 %v2564
      %v2619 = vpop.f32.mrb[0].mxu0
      %v2620 = vadd.f32 0.0, %v2619
      %v2621 = vpop.f32.mrb[0].mxu0
      %v2622 = vpop.f32.mrb[0].mxu0
      %v2623 = vadd.f32 0.0, %v2622
      %v2624 = vpop.f32.mrb[0].mxu0
      %2625 = vmatprep.mubr.bf16.mxu0 0
      %2626 = vmatmul.mubr.bf16.gmra.mrb[0].mxu0 %v2567
      %v2627 = vpop.f32.mrb[0].mxu0
      %v2628 = vadd.f32 0.0, %v2627
      %v2629 = vpop.f32.mrb[0].mxu0
      %v2630 = vpop.f32.mrb[0].mxu0
      %v2631 = vadd.f32 0.0, %v2630
      %v2632 = vpop.f32.mrb[0].mxu0
      %2633 = vdwg.mxu0
      %v2634 = vsel %vm271, %v2355, 0.0
      %v2635 = vsel %vm271, %v2438, 0.0
      %v2636 = vadd.f32 %v2634, %v2635
      %v2637 = vsel %vm271, %v2521, 0.0
      %v2638 = vadd.f32 %v2636, %v2637
      %v2639 = vsel %vm271, %v2604, 0.0
      %v2640 = vadd.f32 %v2638, %v2639
      %v2641 = vsel %vm271, %v2358, 0.0
      %v2642 = vsel %vm271, %v2441, 0.0
      %v2643 = vadd.f32 %v2641, %v2642
      %v2644 = vsel %vm271, %v2524, 0.0
      %v2645 = vadd.f32 %v2643, %v2644
      %v2646 = vsel %vm271, %v2607, 0.0
      %v2647 = vadd.f32 %v2645, %v2646
      %v2648 = vsel %vm271, %v2363, 0.0
      %v2649 = vsel %vm271, %v2446, 0.0
      %v2650 = vadd.f32 %v2648, %v2649
      %v2651 = vsel %vm271, %v2529, 0.0
      %v2652 = vadd.f32 %v2650, %v2651
      %v2653 = vsel %vm271, %v2612, 0.0
      %v2654 = vadd.f32 %v2652, %v2653
      %v2655 = vsel %vm271, %v2366, 0.0
      %v2656 = vsel %vm271, %v2449, 0.0
      %v2657 = vadd.f32 %v2655, %v2656
      %v2658 = vsel %vm271, %v2532, 0.0
      %v2659 = vadd.f32 %v2657, %v2658
      %v2660 = vsel %vm271, %v2615, 0.0
      %v2661 = vadd.f32 %v2659, %v2660
      %v2662 = vsel %vm271, %v2371, 0.0
      %v2663 = vsel %vm271, %v2454, 0.0
      %v2664 = vadd.f32 %v2662, %v2663
      %v2665 = vsel %vm271, %v2537, 0.0
      %v2666 = vadd.f32 %v2664, %v2665
      %v2667 = vsel %vm271, %v2620, 0.0
      %v2668 = vadd.f32 %v2666, %v2667
      %v2669 = vsel %vm271, %v2374, 0.0
      %v2670 = vsel %vm271, %v2457, 0.0
      %v2671 = vadd.f32 %v2669, %v2670
      %v2672 = vsel %vm271, %v2540, 0.0
      %v2673 = vadd.f32 %v2671, %v2672
      %v2674 = vsel %vm271, %v2623, 0.0
      %v2675 = vadd.f32 %v2673, %v2674
      %v2676 = vsel %vm271, %v2379, 0.0
      %v2677 = vsel %vm271, %v2462, 0.0
      %v2678 = vadd.f32 %v2676, %v2677
      %v2679 = vsel %vm271, %v2545, 0.0
      %v2680 = vadd.f32 %v2678, %v2679
      %v2681 = vsel %vm271, %v2628, 0.0
      %v2682 = vadd.f32 %v2680, %v2681
      %v2683 = vsel %vm271, %v2382, 0.0
      %v2684 = vsel %vm271, %v2465, 0.0
      %v2685 = vadd.f32 %v2683, %v2684
      %v2686 = vsel %vm271, %v2548, 0.0
      %v2687 = vadd.f32 %v2685, %v2686
      %v2688 = vsel %vm271, %v2631, 0.0
      %v2689 = vadd.f32 %v2687, %v2688
      %v2690 = vld [vmem:[%s3] sm:$0x1]
      %v2692 = vlaneseq
      %v2693 = vshrl.u32 %v2692, 7
      %v2694 = vsub.s32 0, %v2693
      %v2695 = vrot.slane %v2690, %v2694
      %v2697 = vadd.f32 %v2640, %v2695
      %v2698 = vadd.f32 %v2647, %v2695
      %v2699 = vadd.f32 %v2654, %v2695
      %v2700 = vadd.f32 %v2661, %v2695
      %v2701 = vadd.f32 %v2668, %v2695
      %v2702 = vadd.f32 %v2675, %v2695
      %v2703 = vadd.f32 %v2682, %v2695
      %v2704 = vadd.f32 %v2689, %v2695
      %2705 = vst.msk [vmem:[%s197] sm:$0xff] %vm271, %v2697
      %2706 = vst.msk [vmem:[%s197 + $0x8] sm:$0xff] %vm271, %v2698
      %2707 = vst.msk [vmem:[%s197 + $0x10] sm:$0xff] %vm271, %v2699
      %2708 = vst.msk [vmem:[%s197 + $0x18] sm:$0xff] %vm271, %v2700
      %2709 = vst.msk [vmem:[%s197 + $0x20] sm:$0xff] %vm271, %v2701
      %2710 = vst.msk [vmem:[%s197 + $0x28] sm:$0xff] %vm271, %v2702
      %2711 = vst.msk [vmem:[%s197 + $0x30] sm:$0xff] %vm271, %v2703
      %2712 = vst.msk [vmem:[%s197 + $0x38] sm:$0xff] %vm271, %v2704
      %p2713 = scmp.lt.s32.totalorder %s15, 1
      %s2714 = scalar_select %p2713, %s15, 1
      %s2715 = smul.addr %s2714, 8
      %s2716 = smul.addr %s2715, 8
      %s2717 = scalar_lea.vmem %s4, %s2716
      // Predicated region
      $region37: #{tpu_custom_call.1} parent=35 // pred_check
        %p2718 = pneg %p122
      $region38: #{tpu_custom_call.1} parent=35 // pred_check_branch
        %2720 = sbr.rel (%p2718) target = $region40
      $region39: #{tpu_custom_call.1} parent=35 // pred_region
        _
      $region40: #{tpu_custom_call.1} parent=35 // pred_fallthru
        _
    $region36: #{tpu_custom_call.1} parent=5 // pred_fallthru
      _
    %p2721 = scmp.le.s32.totalorder 2, %s10
    // Predicated region
    $region41: #{tpu_custom_call.1} parent=5 // pred_check
      %p2722 = pneg %p2721
    $region42: #{tpu_custom_call.1} parent=5 // pred_check_branch
      %2724 = sbr.rel (%p2722) target = $region44
    $region43: #{tpu_custom_call.1} parent=5 // pred_region
      %s2725 = ssub.s32 %s10, 2
      // Predicated region
      $region45: #{tpu_custom_call.1} parent=43 // pred_check
        %p2726 = pneg %p128
      $region46: #{tpu_custom_call.1} parent=43 // pred_check_branch
        %2728 = sbr.rel (%p2726) target = $region48
      $region47: #{tpu_custom_call.1} parent=43 // pred_region
        %p2729 = scmp.lt.s32.totalorder %s16, 1
        %s2730 = scalar_select %p2729, %s16, 1
        %s2731 = smul.addr %s2730, 8
        %s2732 = smul.addr %s2731, 8
        %s2733 = scalar_lea.vmem %s4, %s2732
      $region48: #{tpu_custom_call.1} parent=43 // pred_fallthru
        _
    $region44: #{tpu_custom_call.1} parent=5 // pred_fallthru
      _
  $region6: #{tpu_custom_call.1} parent=0 // loop_footer
    %s14 = sadd.s32 1, %s10
  $region7: #{tpu_custom_call.1} parent=0 // loop_footer_branch
    %9 = sbr.rel target = $region3
  $region8: #{tpu_custom_call.1} parent=0 // loop_exit
    _

</llo_original>
